<compile_context>
chip_gen: v7x
topology: tpu7x:2x2x1
jax: 0.10.0
libtpu: 0.0.40
codegen_flags: <defaults>
</compile_context>

<pallas_src>
import functools
import math

import jax
import jax.numpy as jnp
from jax.experimental import pallas as pl
from jax.experimental.pallas import tpu as pltpu


def mha_block_kernel(
    x_ref,
    w_in_ref, b_in_ref,
    w_qkv_ref, b_qkv_ref,
    w_o_ref, b_o_ref,
    ln1_w_ref, ln1_b_ref,
    w_f1_ref, b_f1_ref,
    w_f2_ref, b_f2_ref,
    ln2_w_ref, ln2_b_ref,
    w_out_ref, b_out_ref,
    o_ref,
    *, num_heads, e_real,
):
    bt, seq, d_in = x_ref.shape
    rows = bt * seq
    ep = w_in_ref.shape[1]          # padded embed (multiple of 128)
    heads = num_heads
    dhp = ep // heads               # padded per-head dim
    d_out = o_ref.shape[-1]
    bf16 = jnp.bfloat16
    f32 = jnp.float32
    inv_e = 1.0 / e_real

    # Padded embed columns (index >= e_real) are exactly zero by construction,
    # so LayerNorm statistics use the real-E divisor and a column mask; padded
    # LN weight/bias are zero so padded columns stay zero after LN.
    col_mask = jax.lax.broadcasted_iota(jnp.int32, (1, ep), 1) < e_real

    def layernorm(t, w, b):
        m = jnp.sum(t, axis=-1, keepdims=True) * inv_e
        c = jnp.where(col_mask, t - m, 0.0)
        v = jnp.sum(c * c, axis=-1, keepdims=True) * inv_e
        return c * jax.lax.rsqrt(v + 1e-5) * w + b

    x = x_ref[...].reshape(rows, d_in).astype(bf16)

    # linear_input  (bf16 MXU operands, f32 accumulation)
    h = jnp.dot(x, w_in_ref[...], preferred_element_type=f32) + b_in_ref[...]

    # fused in_proj of nn.MultiheadAttention; 1/sqrt(Dh) already folded into W_q.
    qkv = jnp.dot(h.astype(bf16), w_qkv_ref[...],
                  preferred_element_type=f32) + b_qkv_ref[...]
    q = qkv[:, 0 * ep:1 * ep].astype(bf16)      # 128-lane aligned slices
    k = qkv[:, 1 * ep:2 * ep].astype(bf16)
    v = qkv[:, 2 * ep:3 * ep].astype(bf16)

    # Head-batched attention: one leading batch dim of size bt*heads.
    def to_head_major(t):
        t4 = t.reshape(bt, seq, heads, dhp)
        t4 = pltpu.einshape("bshd->bhsd", t4)
        return t4.reshape(bt * heads, seq, dhp)

    q3, k3, v3 = to_head_major(q), to_head_major(k), to_head_major(v)

    s = jnp.einsum("gqd,gkd->gqk", q3, k3, preferred_element_type=f32)
    s = s - jnp.max(s, axis=-1, keepdims=True)
    p = jnp.exp(s)
    # softmax denom via approximate reciprocal on the EUP (frees VALU slots);
    # probabilities go to bf16 right away for the PV matmul.
    p = (p * pl.reciprocal(jnp.sum(p, axis=-1, keepdims=True),
                           approx=True)).astype(bf16)
    att3 = jnp.einsum("gqk,gkd->gqd", p, v3,
                      preferred_element_type=f32)        # (bt*H, S, Dhp)

    att = att3.reshape(bt, heads, seq, dhp)
    att = pltpu.einshape("bhsd->bshd", att).reshape(rows, ep)

    # out_proj of MHA (rows of W_o are in the same interleaved head layout).
    att = jnp.dot(att.astype(bf16), w_o_ref[...],
                  preferred_element_type=f32) + b_o_ref[...]

    # residual + LayerNorm 1  (f32)
    y = layernorm(h + att, ln1_w_ref[...], ln1_b_ref[...])

    # FFN: Linear -> ReLU -> Linear   (dropout = identity in eval mode)
    f = jnp.dot(y.astype(bf16), w_f1_ref[...],
                preferred_element_type=f32) + b_f1_ref[...]
    f = jnp.maximum(f, 0.0)
    f = jnp.dot(f.astype(bf16), w_f2_ref[...],
                preferred_element_type=f32) + b_f2_ref[...]

    # residual + LayerNorm 2
    z = layernorm(y + f, ln2_w_ref[...], ln2_b_ref[...])

    # linear_output: unpadded d_out columns (tiny masked store is cheaper than a
    # wrapper-side pad + slice round trip over HBM).
    out = jnp.dot(z.astype(bf16), w_out_ref[...],
                  preferred_element_type=f32) + b_out_ref[...]
    o_ref[...] = out.reshape(bt, seq, d_out).astype(o_ref.dtype)


def prepare_params(params, num_heads):
    """One-time (outside the per-call path) padding / bf16 cast / scale folding.

    - embed E is padded per head (Dh -> Dhp) so Ep = H*Dhp is a multiple of 128
      and the head-split reshape stays exact; FFN hidden is padded to 128.
    - 1/sqrt(Dh) is folded into the Q columns of W_qkv (and b_q).
    - All padding is zeros, so padded rows/cols are inert through every matmul,
      ReLU, residual add and (with the real-E LN divisor) LayerNorm.
    """
    (w_in, b_in, w_qkv, b_qkv, w_o, b_o, ln1_w, ln1_b,
     w_f1, b_f1, w_f2, b_f2, ln2_w, ln2_b, w_out, b_out) = params
    d_in, E = w_in.shape
    H = num_heads
    Dh = E // H
    hidden = w_f1.shape[1]
    d_out = w_out.shape[1]

    step = 128 // math.gcd(H, 128)
    Dhp = ((Dh + step - 1) // step) * step     # smallest aligned per-head dim
    Ep = H * Dhp                               # multiple of 128
    Hp = ((hidden + 127) // 128) * 128

    f32 = jnp.float32
    bf = jnp.bfloat16

    def pad_last(a, n):
        return jnp.pad(a, [(0, 0)] * (a.ndim - 1) + [(0, n - a.shape[-1])])

    def pad_first(a, n):
        return jnp.pad(a, [(0, n - a.shape[0])] + [(0, 0)] * (a.ndim - 1))

    def pad_heads_last(a):          # last axis E -> Ep, zero-padded per head
        lead = a.shape[:-1]
        a4 = a.reshape(lead + (H, Dh))
        a4 = jnp.pad(a4, [(0, 0)] * len(lead) + [(0, 0), (0, Dhp - Dh)])
        return a4.reshape(lead + (Ep,))

    def pad_heads_first(a):         # first axis E -> Ep, zero-padded per head
        tail = a.shape[1:]
        a4 = a.reshape((H, Dh) + tail)
        a4 = jnp.pad(a4, [(0, 0), (0, Dhp - Dh)] + [(0, 0)] * len(tail))
        return a4.reshape((Ep,) + tail)

    scale = 1.0 / math.sqrt(Dh)     # folded into the Q projection
    wq, wk, wv = w_qkv[:, :E] * scale, w_qkv[:, E:2 * E], w_qkv[:, 2 * E:]
    bq, bk, bv = b_qkv[:, :E] * scale, b_qkv[:, E:2 * E], b_qkv[:, 2 * E:]

    w_qkv_p = jnp.concatenate(
        [pad_first(pad_heads_last(w), Ep) for w in (wq, wk, wv)], axis=1)
    b_qkv_p = jnp.concatenate([pad_heads_last(b) for b in (bq, bk, bv)], axis=1)

    ordered = (
        pad_last(w_in, Ep).astype(bf),                   # (d_in, Ep)
        pad_last(b_in, Ep).astype(f32),                  # (1, Ep)
        w_qkv_p.astype(bf),                              # (Ep, 3*Ep)
        b_qkv_p.astype(f32),                             # (1, 3*Ep)
        pad_last(pad_heads_first(w_o), Ep).astype(bf),   # (Ep, Ep)
        pad_last(b_o, Ep).astype(f32),                   # (1, Ep)
        pad_last(ln1_w, Ep).astype(f32),                 # zero pads keep pad cols 0
        pad_last(ln1_b, Ep).astype(f32),
        pad_last(pad_first(w_f1, Ep), Hp).astype(bf),    # (Ep, Hp)
        pad_last(b_f1, Hp).astype(f32),
        pad_last(pad_first(w_f2, Hp), Ep).astype(bf),    # (Hp, Ep)
        pad_last(b_f2, Ep).astype(f32),
        pad_last(ln2_w, Ep).astype(f32),
        pad_last(ln2_b, Ep).astype(f32),
        pad_first(w_out, Ep).astype(bf),                 # (Ep, d_out)
        b_out.astype(f32),                               # (1, d_out)
    )
    meta = dict(e_real=E, e_pad=Ep, hid_pad=Hp, dh_pad=Dhp, heads=H,
                d_in=d_in, d_out=d_out)
    return ordered, meta


def multihead_att_block(x, prepared, num_heads):
    ordered, meta = prepared
    B, S, d_in = x.shape
    assert d_in == meta["d_in"]
    E, Ep, Hp = meta["e_real"], meta["e_pad"], meta["hid_pad"]
    Dhp, H, d_out = meta["dh_pad"], meta["heads"], meta["d_out"]

    # ---- generation-aware VMEM budget (v5e/v6e: 128 MiB, v7x: 64 MiB) ----
    try:
        vmem_cap = int(pltpu.get_tpu_info().vmem_capacity_bytes)
    except Exception:
        vmem_cap = 64 * 2**20            # conservative fallback (v7x per-core)
    budget = int(vmem_cap * 0.85)        # headroom for compiler scratch

    w_bytes = sum(int(a.size) * a.dtype.itemsize for a in ordered)

    def per_step_bytes(bt):
        rows = bt * S
        io = 2 * 2 * bt * S * max(d_in, d_out) * x.dtype.itemsize  # in+out, dbl-buf
        act = rows * (8 * Ep + 2 * Hp) * 4                          # f32 act chain
        att = bt * H * S * S * 6 + 3 * rows * Ep * 2                # scores+probs+qkv
        return io + act + att

    # ---- batch tile: big MXU M, but always >= 2 grid steps when B >= 2 so both
    # v7x TensorCores get work; VMEM-aware so the S^2 scores always fit. ----
    # TODO(synk): flash-style KV tiling once bt=1 no longer fits (very long S).
    target_rows = 512
    bt = 1
    for cand in range(1, B + 1):
        if B % cand:
            continue
        if B >= 2 and B // cand < 2:
            continue
        if cand * S > target_rows:
            continue
        if w_bytes + per_step_bytes(cand) > budget:
            continue
        bt = cand
    grid = (B // bt,)
    vmem_limit = int(min(budget, max(32 * 2**20,
                                     2 * (w_bytes + per_step_bytes(bt)))))

    # ---- specs: pipelined activations, single-buffered resident weights -----
    x_spec = pl.BlockSpec((bt, S, d_in), lambda i: (i, 0, 0))
    w_specs = [pl.BlockSpec(memory_space=pltpu.MemorySpace.VMEM) for _ in ordered]
    out_spec = pl.BlockSpec((bt, S, d_out), lambda i: (i, 0, 0))

    # ---- advisory cost estimate for the XLA scheduler ------------------------
    flops = (2 * B * S * (d_in * Ep + 4 * Ep * Ep + 2 * Ep * Hp + Ep * d_out)
             + 4 * B * H * S * S * Dhp)
    transcendentals = B * H * S * S + 2 * B * S
    bytes_accessed = (int(x.size) * x.dtype.itemsize + w_bytes
                      + B * S * d_out * x.dtype.itemsize)

    kernel = functools.partial(mha_block_kernel, num_heads=H, e_real=E)
    return pl.pallas_call(
        kernel,
        out_shape=jax.ShapeDtypeStruct((B, S, d_out), x.dtype),
        grid=grid,
        in_specs=[x_spec] + w_specs,
        out_specs=out_spec,
        compiler_params=pltpu.CompilerParams(
            dimension_semantics=("parallel",),
            vmem_limit_bytes=vmem_limit,
        ),
        cost_estimate=pl.CostEstimate(
            flops=int(flops),
            transcendentals=int(transcendentals),
            bytes_accessed=int(bytes_accessed),
        ),
    )(x, *ordered)


def make_params(key, org_dims, num_heads, hidden_channels=0.5):
    # Mirror the __init__ shape logic of the PyTorch module.
    embed = org_dims
    if org_dims % num_heads != 0:
        embed = (org_dims + num_heads - 1) // num_heads * num_heads
    if not hidden_channels or hidden_channels >= embed:
        hidden = int(embed * 0.5)
    else:
        hidden = int(embed * hidden_channels)

    ks = jax.random.split(key, 12)

    def w(k, shape, s=0.1):
        return jax.random.normal(k, shape, jnp.float32) * s

    params = (
        w(ks[0], (org_dims, embed)),            # W_in   (x @ W form)
        w(ks[1], (1, embed), 0.01),             # b_in
        w(ks[2], (embed, 3 * embed)),           # W_qkv (fused in_proj, transposed)
        w(ks[3], (1, 3 * embed), 0.01),         # b_qkv
        w(ks[4], (embed, embed)),               # W_o (out_proj)
        w(ks[5], (1, embed), 0.01),             # b_o
        jnp.ones((1, embed), jnp.float32),      # ln1 weight
        jnp.zeros((1, embed), jnp.float32),     # ln1 bias
        w(ks[6], (embed, hidden)),              # W_f1
        w(ks[7], (1, hidden), 0.01),            # b_f1
        w(ks[8], (hidden, embed)),              # W_f2
        w(ks[9], (1, embed), 0.01),             # b_f2
        jnp.ones((1, embed), jnp.float32),      # ln2 weight
        jnp.zeros((1, embed), jnp.float32),     # ln2 bias
        w(ks[10], (embed, org_dims)),           # W_out
        w(ks[11], (1, org_dims), 0.01),         # b_out
    )
    return params, embed, hidden


def reference(x, params, num_heads):
    # Pure-JAX f32 reference matching the PyTorch module in eval mode.
    (w_in, b_in, w_qkv, b_qkv, w_o, b_o, ln1_w, ln1_b,
     w_f1, b_f1, w_f2, b_f2, ln2_w, ln2_b, w_out, b_out) = params
    h = x @ w_in + b_in
    E = h.shape[-1]
    Dh = E // num_heads
    qkv = h @ w_qkv + b_qkv
    q, k, v = qkv[..., :E], qkv[..., E:2 * E], qkv[..., 2 * E:]

    def split(t):
        B, S, _ = t.shape
        return t.reshape(B, S, num_heads, Dh).transpose(0, 2, 1, 3)

    qh, kh, vh = split(q), split(k), split(v)
    s = jnp.einsum('bhqd,bhkd->bhqk', qh, kh) / jnp.sqrt(jnp.float32(Dh))
    p = jax.nn.softmax(s, axis=-1)
    att = jnp.einsum('bhqk,bhkd->bhqd', p, vh).transpose(0, 2, 1, 3).reshape(h.shape)
    att = att @ w_o + b_o

    def ln(t, w_, b_):
        m = t.mean(-1, keepdims=True)
        var = ((t - m) ** 2).mean(-1, keepdims=True)
        return (t - m) / jnp.sqrt(var + 1e-5) * w_ + b_

    y = ln(h + att, ln1_w, ln1_b)
    f = jnp.maximum(y @ w_f1 + b_f1, 0.0) @ w_f2 + b_f2
    z = ln(y + f, ln2_w, ln2_b)
    return z @ w_out + b_out


if __name__ == "__main__":
    B, S, ORG_DIMS, NUM_HEADS = 2, 8, 32, 4

    key = jax.random.PRNGKey(0)
    kx, kp = jax.random.split(key)
    x = jax.random.normal(kx, (B, S, ORG_DIMS), jnp.float32)
    params, embed, hidden = make_params(kp, ORG_DIMS, NUM_HEADS, hidden_channels=0.5)

    # One-time weight prep (pad + bf16 cast + scale fold) outside the call path.
    prepared = prepare_params(params, NUM_HEADS)

    out = multihead_att_block(x, prepared, NUM_HEADS)
    out = jax.block_until_ready(out)

    ref = reference(x, params, NUM_HEADS)
    assert out.shape == (B, S, ORG_DIMS)
    # bf16 MXU operands + approx reciprocal -> looser tolerance than pure f32.
    err = float(jnp.max(jnp.abs(out - ref)))
    ref_scale = float(jnp.max(jnp.abs(ref)))
    assert err <= 5e-2 * max(1.0, ref_scale), (err, ref_scale)

    print("KERNEL_OK")
</pallas_src>

<mosaic_0001>
module attributes {stable_mosaic.version = 11 : i64} {
  func.func @mha_block_kernel(%arg0: i32, %arg1: memref<1x8x32xf32, #tpu.memory_space<vmem>>, %arg2: memref<32x128xbf16, #tpu.memory_space<vmem>>, %arg3: memref<1x128xf32, #tpu.memory_space<vmem>>, %arg4: memref<128x384xbf16, #tpu.memory_space<vmem>>, %arg5: memref<1x384xf32, #tpu.memory_space<vmem>>, %arg6: memref<128x128xbf16, #tpu.memory_space<vmem>>, %arg7: memref<1x128xf32, #tpu.memory_space<vmem>>, %arg8: memref<1x128xf32, #tpu.memory_space<vmem>>, %arg9: memref<1x128xf32, #tpu.memory_space<vmem>>, %arg10: memref<128x128xbf16, #tpu.memory_space<vmem>>, %arg11: memref<1x128xf32, #tpu.memory_space<vmem>>, %arg12: memref<128x128xbf16, #tpu.memory_space<vmem>>, %arg13: memref<1x128xf32, #tpu.memory_space<vmem>>, %arg14: memref<1x128xf32, #tpu.memory_space<vmem>>, %arg15: memref<1x128xf32, #tpu.memory_space<vmem>>, %arg16: memref<128x32xbf16, #tpu.memory_space<vmem>>, %arg17: memref<1x32xf32, #tpu.memory_space<vmem>>, %arg18: memref<1x8x32xf32, #tpu.memory_space<vmem>>) attributes {dimension_semantics = [#tpu.dimension_semantics<parallel>], iteration_bounds = array<i64: 2>, scalar_prefetch = 0 : i64, scratch_operands = 0 : i64, tpu.core_type = #tpu.core_type<tc>, window_params = [{transform_indices = @transform_0, window_bounds = array<i64: 1, 8, 32>}, {pipeline_mode = #tpu.pipeline_mode<synchronous>, transform_indices = @transform_1, window_bounds = array<i64: 32, 128>}, {pipeline_mode = #tpu.pipeline_mode<synchronous>, transform_indices = @transform_2, window_bounds = array<i64: 1, 128>}, {pipeline_mode = #tpu.pipeline_mode<synchronous>, transform_indices = @transform_3, window_bounds = array<i64: 128, 384>}, {pipeline_mode = #tpu.pipeline_mode<synchronous>, transform_indices = @transform_4, window_bounds = array<i64: 1, 384>}, {pipeline_mode = #tpu.pipeline_mode<synchronous>, transform_indices = @transform_5, window_bounds = array<i64: 128, 128>}, {pipeline_mode = #tpu.pipeline_mode<synchronous>, transform_indices = @transform_6, window_bounds = array<i64: 1, 128>}, {pipeline_mode = #tpu.pipeline_mode<synchronous>, transform_indices = @transform_7, window_bounds = array<i64: 1, 128>}, {pipeline_mode = #tpu.pipeline_mode<synchronous>, transform_indices = @transform_8, window_bounds = array<i64: 1, 128>}, {pipeline_mode = #tpu.pipeline_mode<synchronous>, transform_indices = @transform_9, window_bounds = array<i64: 128, 128>}, {pipeline_mode = #tpu.pipeline_mode<synchronous>, transform_indices = @transform_10, window_bounds = array<i64: 1, 128>}, {pipeline_mode = #tpu.pipeline_mode<synchronous>, transform_indices = @transform_11, window_bounds = array<i64: 128, 128>}, {pipeline_mode = #tpu.pipeline_mode<synchronous>, transform_indices = @transform_12, window_bounds = array<i64: 1, 128>}, {pipeline_mode = #tpu.pipeline_mode<synchronous>, transform_indices = @transform_13, window_bounds = array<i64: 1, 128>}, {pipeline_mode = #tpu.pipeline_mode<synchronous>, transform_indices = @transform_14, window_bounds = array<i64: 1, 128>}, {pipeline_mode = #tpu.pipeline_mode<synchronous>, transform_indices = @transform_15, window_bounds = array<i64: 128, 32>}, {pipeline_mode = #tpu.pipeline_mode<synchronous>, transform_indices = @transform_16, window_bounds = array<i64: 1, 32>}, {transform_indices = @transform_17, window_bounds = array<i64: 1, 8, 32>}]} {
    %0 = tpu.iota {dimensions = array<i32: 1>} : vector<1x128xi32>
    %c32_i32 = arith.constant 32 : i32
    %1 = vector.broadcast %c32_i32 : i32 to vector<1x128xi32>
    %2 = arith.cmpi slt, %0, %1 : vector<1x128xi32>
    %c0 = arith.constant 0 : index
    %c0_0 = arith.constant 0 : index
    %c0_1 = arith.constant 0 : index
    %3 = vector.load %arg1[%c0, %c0_0, %c0_1] : memref<1x8x32xf32, #tpu.memory_space<vmem>>, vector<1x8x32xf32>
    %4 = vector.shape_cast %3 : vector<1x8x32xf32> to vector<8x32xf32>
    %5 = arith.truncf %4 : vector<8x32xf32> to vector<8x32xbf16>
    %c0_2 = arith.constant 0 : index
    %c0_3 = arith.constant 0 : index
    %6 = vector.load %arg2[%c0_2, %c0_3] : memref<32x128xbf16, #tpu.memory_space<vmem>>, vector<32x128xbf16>
    %cst = arith.constant dense<0.000000e+00> : vector<8x128xf32>
    %7 = tpu.matmul %5, %6, %cst {dimension_numbers = #tpu.dot_dimension_numbers<[1], [0], [0], [1], [0, 0, 1, 1], [], []>} : vector<8x32xbf16>, vector<32x128xbf16>, vector<8x128xf32> -> vector<8x128xf32>
    %c0_4 = arith.constant 0 : index
    %c0_5 = arith.constant 0 : index
    %8 = vector.load %arg3[%c0_4, %c0_5] : memref<1x128xf32, #tpu.memory_space<vmem>>, vector<1x128xf32>
    %9 = vector.broadcast %8 : vector<1x128xf32> to vector<8x128xf32>
    %10 = arith.addf %7, %9 : vector<8x128xf32>
    %11 = arith.truncf %10 : vector<8x128xf32> to vector<8x128xbf16>
    %c0_6 = arith.constant 0 : index
    %c0_7 = arith.constant 0 : index
    %12 = vector.load %arg4[%c0_6, %c0_7] : memref<128x384xbf16, #tpu.memory_space<vmem>>, vector<128x384xbf16>
    %cst_8 = arith.constant dense<0.000000e+00> : vector<8x384xf32>
    %13 = tpu.matmul %11, %12, %cst_8 {dimension_numbers = #tpu.dot_dimension_numbers<[1], [0], [0], [1], [0, 0, 1, 1], [], []>} : vector<8x128xbf16>, vector<128x384xbf16>, vector<8x384xf32> -> vector<8x384xf32>
    %c0_9 = arith.constant 0 : index
    %c0_10 = arith.constant 0 : index
    %14 = vector.load %arg5[%c0_9, %c0_10] : memref<1x384xf32, #tpu.memory_space<vmem>>, vector<1x384xf32>
    %15 = vector.broadcast %14 : vector<1x384xf32> to vector<8x384xf32>
    %16 = arith.addf %13, %15 : vector<8x384xf32>
    %17 = vector.extract_strided_slice %16 {offsets = [0, 0], sizes = [8, 128], strides = [1, 1]} : vector<8x384xf32> to vector<8x128xf32>
    %18 = arith.truncf %17 : vector<8x128xf32> to vector<8x128xbf16>
    %19 = vector.extract_strided_slice %16 {offsets = [0, 128], sizes = [8, 128], strides = [1, 1]} : vector<8x384xf32> to vector<8x128xf32>
    %20 = arith.truncf %19 : vector<8x128xf32> to vector<8x128xbf16>
    %21 = vector.extract_strided_slice %16 {offsets = [0, 256], sizes = [8, 128], strides = [1, 1]} : vector<8x384xf32> to vector<8x128xf32>
    %22 = arith.truncf %21 : vector<8x128xf32> to vector<8x128xbf16>
    %23 = vector.shape_cast %18 : vector<8x128xbf16> to vector<1x8x4x32xbf16>
    %24 = tpu.transpose %23, [0, 2, 1, 3] : vector<1x8x4x32xbf16> -> vector<1x4x8x32xbf16>
    %25 = vector.shape_cast %24 : vector<1x4x8x32xbf16> to vector<4x8x32xbf16>
    %26 = vector.shape_cast %20 : vector<8x128xbf16> to vector<1x8x4x32xbf16>
    %27 = tpu.transpose %26, [0, 2, 1, 3] : vector<1x8x4x32xbf16> -> vector<1x4x8x32xbf16>
    %28 = vector.shape_cast %27 : vector<1x4x8x32xbf16> to vector<4x8x32xbf16>
    %29 = vector.shape_cast %22 : vector<8x128xbf16> to vector<1x8x4x32xbf16>
    %30 = tpu.transpose %29, [0, 2, 1, 3] : vector<1x8x4x32xbf16> -> vector<1x4x8x32xbf16>
    %31 = vector.shape_cast %30 : vector<1x4x8x32xbf16> to vector<4x8x32xbf16>
    "tpu.trace_start"() <{level = 10 : i32, message = "gqd,gkd->gqk"}> : () -> ()
    %cst_11 = arith.constant dense<0.000000e+00> : vector<4x8x8xf32>
    %32 = tpu.matmul %25, %28, %cst_11 {dimension_numbers = #tpu.dot_dimension_numbers<[2], [2], [1], [1], [0, 0, 0, 1, 1, 1], [0], [0]>} : vector<4x8x32xbf16>, vector<4x8x32xbf16>, vector<4x8x8xf32> -> vector<4x8x8xf32>
    "tpu.trace_stop"() : () -> ()
    %cst_12 = arith.constant dense<0xFF800000> : vector<4x8xf32>
    %33 = vector.multi_reduction <maximumf>, %32, %cst_12 [2] : vector<4x8x8xf32> to vector<4x8xf32>
    %34 = vector.shape_cast %33 : vector<4x8xf32> to vector<4x8x1xf32>
    %35 = vector.broadcast %34 : vector<4x8x1xf32> to vector<4x8x8xf32>
    %36 = arith.subf %32, %35 : vector<4x8x8xf32>
    %37 = math.exp %36 : vector<4x8x8xf32>
    %cst_13 = arith.constant dense<0.000000e+00> : vector<4x8xf32>
    %38 = vector.multi_reduction <add>, %37, %cst_13 [2] : vector<4x8x8xf32> to vector<4x8xf32>
    %39 = vector.shape_cast %38 : vector<4x8xf32> to vector<4x8x1xf32>
    %40 = tpu.reciprocal %39 {approx = true} : vector<4x8x1xf32> -> vector<4x8x1xf32>
    %41 = vector.broadcast %40 : vector<4x8x1xf32> to vector<4x8x8xf32>
    %42 = arith.mulf %37, %41 : vector<4x8x8xf32>
    %43 = arith.truncf %42 : vector<4x8x8xf32> to vector<4x8x8xbf16>
    "tpu.trace_start"() <{level = 10 : i32, message = "gqk,gkd->gqd"}> : () -> ()
    %cst_14 = arith.constant dense<0.000000e+00> : vector<4x8x32xf32>
    %44 = tpu.matmul %43, %31, %cst_14 {dimension_numbers = #tpu.dot_dimension_numbers<[2], [1], [1], [2], [0, 0, 0, 1, 1, 2], [0], [0]>} : vector<4x8x8xbf16>, vector<4x8x32xbf16>, vector<4x8x32xf32> -> vector<4x8x32xf32>
    "tpu.trace_stop"() : () -> ()
    %45 = vector.shape_cast %44 : vector<4x8x32xf32> to vector<1x4x8x32xf32>
    %46 = tpu.transpose %45, [0, 2, 1, 3] : vector<1x4x8x32xf32> -> vector<1x8x4x32xf32>
    %47 = vector.shape_cast %46 : vector<1x8x4x32xf32> to vector<8x128xf32>
    %48 = arith.truncf %47 : vector<8x128xf32> to vector<8x128xbf16>
    %c0_15 = arith.constant 0 : index
    %c0_16 = arith.constant 0 : index
    %49 = vector.load %arg6[%c0_15, %c0_16] : memref<128x128xbf16, #tpu.memory_space<vmem>>, vector<128x128xbf16>
    %cst_17 = arith.constant dense<0.000000e+00> : vector<8x128xf32>
    %50 = tpu.matmul %48, %49, %cst_17 {dimension_numbers = #tpu.dot_dimension_numbers<[1], [0], [0], [1], [0, 0, 1, 1], [], []>} : vector<8x128xbf16>, vector<128x128xbf16>, vector<8x128xf32> -> vector<8x128xf32>
    %c0_18 = arith.constant 0 : index
    %c0_19 = arith.constant 0 : index
    %51 = vector.load %arg7[%c0_18, %c0_19] : memref<1x128xf32, #tpu.memory_space<vmem>>, vector<1x128xf32>
    %52 = vector.broadcast %51 : vector<1x128xf32> to vector<8x128xf32>
    %53 = arith.addf %50, %52 : vector<8x128xf32>
    %54 = arith.addf %10, %53 : vector<8x128xf32>
    %c0_20 = arith.constant 0 : index
    %c0_21 = arith.constant 0 : index
    %55 = vector.load %arg8[%c0_20, %c0_21] : memref<1x128xf32, #tpu.memory_space<vmem>>, vector<1x128xf32>
    %c0_22 = arith.constant 0 : index
    %c0_23 = arith.constant 0 : index
    %56 = vector.load %arg9[%c0_22, %c0_23] : memref<1x128xf32, #tpu.memory_space<vmem>>, vector<1x128xf32>
    %cst_24 = arith.constant dense<0.000000e+00> : vector<8xf32>
    %57 = vector.multi_reduction <add>, %54, %cst_24 [1] : vector<8x128xf32> to vector<8xf32>
    %58 = vector.shape_cast %57 : vector<8xf32> to vector<8x1xf32>
    %cst_25 = arith.constant 3.125000e-02 : f32
    %59 = vector.broadcast %cst_25 : f32 to vector<8x1xf32>
    %60 = arith.mulf %58, %59 : vector<8x1xf32>
    %61 = vector.broadcast %60 : vector<8x1xf32> to vector<8x128xf32>
    %62 = arith.subf %54, %61 : vector<8x128xf32>
    %cst_26 = arith.constant 0.000000e+00 : f32
    %63 = vector.shape_cast %2 : vector<1x128xi1> to vector<1x128xi1>
    %64 = vector.broadcast %63 : vector<1x128xi1> to vector<8x128xi1>
    %65 = vector.broadcast %cst_26 : f32 to vector<8x128xf32>
    %66 = arith.select %64, %62, %65 : vector<8x128xi1>, vector<8x128xf32>
    %67 = arith.mulf %66, %66 : vector<8x128xf32>
    %cst_27 = arith.constant dense<0.000000e+00> : vector<8xf32>
    %68 = vector.multi_reduction <add>, %67, %cst_27 [1] : vector<8x128xf32> to vector<8xf32>
    %69 = vector.shape_cast %68 : vector<8xf32> to vector<8x1xf32>
    %cst_28 = arith.constant 3.125000e-02 : f32
    %70 = vector.broadcast %cst_28 : f32 to vector<8x1xf32>
    %71 = arith.mulf %69, %70 : vector<8x1xf32>
    %cst_29 = arith.constant 9.99999974E-6 : f32
    %72 = vector.broadcast %cst_29 : f32 to vector<8x1xf32>
    %73 = arith.addf %71, %72 : vector<8x1xf32>
    %74 = math.rsqrt %73 : vector<8x1xf32>
    %75 = vector.broadcast %74 : vector<8x1xf32> to vector<8x128xf32>
    %76 = arith.mulf %66, %75 : vector<8x128xf32>
    %77 = vector.broadcast %55 : vector<1x128xf32> to vector<8x128xf32>
    %78 = arith.mulf %76, %77 : vector<8x128xf32>
    %79 = vector.broadcast %56 : vector<1x128xf32> to vector<8x128xf32>
    %80 = arith.addf %78, %79 : vector<8x128xf32>
    %81 = arith.truncf %80 : vector<8x128xf32> to vector<8x128xbf16>
    %c0_30 = arith.constant 0 : index
    %c0_31 = arith.constant 0 : index
    %82 = vector.load %arg10[%c0_30, %c0_31] : memref<128x128xbf16, #tpu.memory_space<vmem>>, vector<128x128xbf16>
    %cst_32 = arith.constant dense<0.000000e+00> : vector<8x128xf32>
    %83 = tpu.matmul %81, %82, %cst_32 {dimension_numbers = #tpu.dot_dimension_numbers<[1], [0], [0], [1], [0, 0, 1, 1], [], []>} : vector<8x128xbf16>, vector<128x128xbf16>, vector<8x128xf32> -> vector<8x128xf32>
    %c0_33 = arith.constant 0 : index
    %c0_34 = arith.constant 0 : index
    %84 = vector.load %arg11[%c0_33, %c0_34] : memref<1x128xf32, #tpu.memory_space<vmem>>, vector<1x128xf32>
    %85 = vector.broadcast %84 : vector<1x128xf32> to vector<8x128xf32>
    %86 = arith.addf %83, %85 : vector<8x128xf32>
    %cst_35 = arith.constant 0.000000e+00 : f32
    %87 = vector.broadcast %cst_35 : f32 to vector<8x128xf32>
    %88 = arith.maximumf %86, %87 : vector<8x128xf32>
    %89 = arith.truncf %88 : vector<8x128xf32> to vector<8x128xbf16>
    %c0_36 = arith.constant 0 : index
    %c0_37 = arith.constant 0 : index
    %90 = vector.load %arg12[%c0_36, %c0_37] : memref<128x128xbf16, #tpu.memory_space<vmem>>, vector<128x128xbf16>
    %cst_38 = arith.constant dense<0.000000e+00> : vector<8x128xf32>
    %91 = tpu.matmul %89, %90, %cst_38 {dimension_numbers = #tpu.dot_dimension_numbers<[1], [0], [0], [1], [0, 0, 1, 1], [], []>} : vector<8x128xbf16>, vector<128x128xbf16>, vector<8x128xf32> -> vector<8x128xf32>
    %c0_39 = arith.constant 0 : index
    %c0_40 = arith.constant 0 : index
    %92 = vector.load %arg13[%c0_39, %c0_40] : memref<1x128xf32, #tpu.memory_space<vmem>>, vector<1x128xf32>
    %93 = vector.broadcast %92 : vector<1x128xf32> to vector<8x128xf32>
    %94 = arith.addf %91, %93 : vector<8x128xf32>
    %95 = arith.addf %80, %94 : vector<8x128xf32>
    %c0_41 = arith.constant 0 : index
    %c0_42 = arith.constant 0 : index
    %96 = vector.load %arg14[%c0_41, %c0_42] : memref<1x128xf32, #tpu.memory_space<vmem>>, vector<1x128xf32>
    %c0_43 = arith.constant 0 : index
    %c0_44 = arith.constant 0 : index
    %97 = vector.load %arg15[%c0_43, %c0_44] : memref<1x128xf32, #tpu.memory_space<vmem>>, vector<1x128xf32>
    %cst_45 = arith.constant dense<0.000000e+00> : vector<8xf32>
    %98 = vector.multi_reduction <add>, %95, %cst_45 [1] : vector<8x128xf32> to vector<8xf32>
    %99 = vector.shape_cast %98 : vector<8xf32> to vector<8x1xf32>
    %cst_46 = arith.constant 3.125000e-02 : f32
    %100 = vector.broadcast %cst_46 : f32 to vector<8x1xf32>
    %101 = arith.mulf %99, %100 : vector<8x1xf32>
    %102 = vector.broadcast %101 : vector<8x1xf32> to vector<8x128xf32>
    %103 = arith.subf %95, %102 : vector<8x128xf32>
    %cst_47 = arith.constant 0.000000e+00 : f32
    %104 = vector.shape_cast %2 : vector<1x128xi1> to vector<1x128xi1>
    %105 = vector.broadcast %104 : vector<1x128xi1> to vector<8x128xi1>
    %106 = vector.broadcast %cst_47 : f32 to vector<8x128xf32>
    %107 = arith.select %105, %103, %106 : vector<8x128xi1>, vector<8x128xf32>
    %108 = arith.mulf %107, %107 : vector<8x128xf32>
    %cst_48 = arith.constant dense<0.000000e+00> : vector<8xf32>
    %109 = vector.multi_reduction <add>, %108, %cst_48 [1] : vector<8x128xf32> to vector<8xf32>
    %110 = vector.shape_cast %109 : vector<8xf32> to vector<8x1xf32>
    %cst_49 = arith.constant 3.125000e-02 : f32
    %111 = vector.broadcast %cst_49 : f32 to vector<8x1xf32>
    %112 = arith.mulf %110, %111 : vector<8x1xf32>
    %cst_50 = arith.constant 9.99999974E-6 : f32
    %113 = vector.broadcast %cst_50 : f32 to vector<8x1xf32>
    %114 = arith.addf %112, %113 : vector<8x1xf32>
    %115 = math.rsqrt %114 : vector<8x1xf32>
    %116 = vector.broadcast %115 : vector<8x1xf32> to vector<8x128xf32>
    %117 = arith.mulf %107, %116 : vector<8x128xf32>
    %118 = vector.broadcast %96 : vector<1x128xf32> to vector<8x128xf32>
    %119 = arith.mulf %117, %118 : vector<8x128xf32>
    %120 = vector.broadcast %97 : vector<1x128xf32> to vector<8x128xf32>
    %121 = arith.addf %119, %120 : vector<8x128xf32>
    %122 = arith.truncf %121 : vector<8x128xf32> to vector<8x128xbf16>
    %c0_51 = arith.constant 0 : index
    %c0_52 = arith.constant 0 : index
    %123 = vector.load %arg16[%c0_51, %c0_52] : memref<128x32xbf16, #tpu.memory_space<vmem>>, vector<128x32xbf16>
    %cst_53 = arith.constant dense<0.000000e+00> : vector<8x32xf32>
    %124 = tpu.matmul %122, %123, %cst_53 {dimension_numbers = #tpu.dot_dimension_numbers<[1], [0], [0], [1], [0, 0, 1, 1], [], []>} : vector<8x128xbf16>, vector<128x32xbf16>, vector<8x32xf32> -> vector<8x32xf32>
    %c0_54 = arith.constant 0 : index
    %c0_55 = arith.constant 0 : index
    %125 = vector.load %arg17[%c0_54, %c0_55] : memref<1x32xf32, #tpu.memory_space<vmem>>, vector<1x32xf32>
    %126 = vector.broadcast %125 : vector<1x32xf32> to vector<8x32xf32>
    %127 = arith.addf %124, %126 : vector<8x32xf32>
    %128 = vector.shape_cast %127 : vector<8x32xf32> to vector<1x8x32xf32>
    %c0_56 = arith.constant 0 : index
    %c0_57 = arith.constant 0 : index
    %c0_58 = arith.constant 0 : index
    %129 = vector.load %arg18[%c0_56, %c0_57, %c0_58] : memref<1x8x32xf32, #tpu.memory_space<vmem>>, vector<1x8x32xf32>
    tpu.vector_store %arg18[%c0_56, %c0_57, %c0_58], %128 {strides = array<i32>} : memref<1x8x32xf32, #tpu.memory_space<vmem>>, vector<1x8x32xf32>,
    return
  }
  func.func @transform_0(%arg0: i32) -> (i32, i32, i32) {
    %c0_i32 = arith.constant 0 : i32
    %c0_i32_0 = arith.constant 0 : i32
    %c0_i32_1 = arith.constant 0 : i32
    return %arg0, %c0_i32, %c0_i32_0 : i32, i32, i32
  }
  func.func @transform_1(%arg0: i32) -> (i32, i32) {
    %c0_i32 = arith.constant 0 : i32
    %c0_i32_0 = arith.constant 0 : i32
    %c0_i32_1 = arith.constant 0 : i32
    return %c0_i32, %c0_i32_0 : i32, i32
  }
  func.func @transform_2(%arg0: i32) -> (i32, i32) {
    %c0_i32 = arith.constant 0 : i32
    %c0_i32_0 = arith.constant 0 : i32
    %c0_i32_1 = arith.constant 0 : i32
    return %c0_i32, %c0_i32_0 : i32, i32
  }
  func.func @transform_3(%arg0: i32) -> (i32, i32) {
    %c0_i32 = arith.constant 0 : i32
    %c0_i32_0 = arith.constant 0 : i32
    %c0_i32_1 = arith.constant 0 : i32
    return %c0_i32, %c0_i32_0 : i32, i32
  }
  func.func @transform_4(%arg0: i32) -> (i32, i32) {
    %c0_i32 = arith.constant 0 : i32
    %c0_i32_0 = arith.constant 0 : i32
    %c0_i32_1 = arith.constant 0 : i32
    return %c0_i32, %c0_i32_0 : i32, i32
  }
  func.func @transform_5(%arg0: i32) -> (i32, i32) {
    %c0_i32 = arith.constant 0 : i32
    %c0_i32_0 = arith.constant 0 : i32
    %c0_i32_1 = arith.constant 0 : i32
    return %c0_i32, %c0_i32_0 : i32, i32
  }
  func.func @transform_6(%arg0: i32) -> (i32, i32) {
    %c0_i32 = arith.constant 0 : i32
    %c0_i32_0 = arith.constant 0 : i32
    %c0_i32_1 = arith.constant 0 : i32
    return %c0_i32, %c0_i32_0 : i32, i32
  }
  func.func @transform_7(%arg0: i32) -> (i32, i32) {
    %c0_i32 = arith.constant 0 : i32
    %c0_i32_0 = arith.constant 0 : i32
    %c0_i32_1 = arith.constant 0 : i32
    return %c0_i32, %c0_i32_0 : i32, i32
  }
  func.func @transform_8(%arg0: i32) -> (i32, i32) {
    %c0_i32 = arith.constant 0 : i32
    %c0_i32_0 = arith.constant 0 : i32
    %c0_i32_1 = arith.constant 0 : i32
    return %c0_i32, %c0_i32_0 : i32, i32
  }
  func.func @transform_9(%arg0: i32) -> (i32, i32) {
    %c0_i32 = arith.constant 0 : i32
    %c0_i32_0 = arith.constant 0 : i32
    %c0_i32_1 = arith.constant 0 : i32
    return %c0_i32, %c0_i32_0 : i32, i32
  }
  func.func @transform_10(%arg0: i32) -> (i32, i32) {
    %c0_i32 = arith.constant 0 : i32
    %c0_i32_0 = arith.constant 0 : i32
    %c0_i32_1 = arith.constant 0 : i32
    return %c0_i32, %c0_i32_0 : i32, i32
  }
  func.func @transform_11(%arg0: i32) -> (i32, i32) {
    %c0_i32 = arith.constant 0 : i32
    %c0_i32_0 = arith.constant 0 : i32
    %c0_i32_1 = arith.constant 0 : i32
    return %c0_i32, %c0_i32_0 : i32, i32
  }
  func.func @transform_12(%arg0: i32) -> (i32, i32) {
    %c0_i32 = arith.constant 0 : i32
    %c0_i32_0 = arith.constant 0 : i32
    %c0_i32_1 = arith.constant 0 : i32
    return %c0_i32, %c0_i32_0 : i32, i32
  }
  func.func @transform_13(%arg0: i32) -> (i32, i32) {
    %c0_i32 = arith.constant 0 : i32
    %c0_i32_0 = arith.constant 0 : i32
    %c0_i32_1 = arith.constant 0 : i32
    return %c0_i32, %c0_i32_0 : i32, i32
  }
  func.func @transform_14(%arg0: i32) -> (i32, i32) {
    %c0_i32 = arith.constant 0 : i32
    %c0_i32_0 = arith.constant 0 : i32
    %c0_i32_1 = arith.constant 0 : i32
    return %c0_i32, %c0_i32_0 : i32, i32
  }
  func.func @transform_15(%arg0: i32) -> (i32, i32) {
    %c0_i32 = arith.constant 0 : i32
    %c0_i32_0 = arith.constant 0 : i32
    %c0_i32_1 = arith.constant 0 : i32
    return %c0_i32, %c0_i32_0 : i32, i32
  }
  func.func @transform_16(%arg0: i32) -> (i32, i32) {
    %c0_i32 = arith.constant 0 : i32
    %c0_i32_0 = arith.constant 0 : i32
    %c0_i32_1 = arith.constant 0 : i32
    return %c0_i32, %c0_i32_0 : i32, i32
  }
  func.func @transform_17(%arg0: i32) -> (i32, i32, i32) {
    %c0_i32 = arith.constant 0 : i32
    %c0_i32_0 = arith.constant 0 : i32
    %c0_i32_1 = arith.constant 0 : i32
    return %arg0, %c0_i32, %c0_i32_0 : i32, i32, i32
  }
}

</mosaic_0001>

<llo_original>
// kernel: tpu_custom_call.1
$region0: #{tpu_custom_call.1}
  #allocation0 [shape = 'u32[]', space=smem, size = 0x4, offset = 0x4, fixed_abs, tag = 'smem constant byte address 0x4 - core index']
  #allocation1 [shape = 'u32[144,128]{1,0:T(1,128)}', space=vmem, size = 0x12000, scoped, tag = 'internal scratch']
  %s0 = inlined_call_operand.vmem [shape: f32[2,8,32], index: 0, kind: input, shape index: {}]
  %s1 = inlined_call_operand.hbm [shape: bf16[32,128], index: 1, kind: input, shape index: {}]
  %s2 = inlined_call_operand.vmem [shape: f32[1,128], index: 2, kind: input, shape index: {}]
  %s3 = inlined_call_operand.hbm [shape: bf16[128,384], index: 3, kind: input, shape index: {}]
  %s4 = inlined_call_operand.vmem [shape: f32[1,384], index: 4, kind: input, shape index: {}]
  %s5 = inlined_call_operand.vmem [shape: bf16[128,128], index: 5, kind: input, shape index: {}]
  %s6 = inlined_call_operand.vmem [shape: f32[1,128], index: 6, kind: input, shape index: {}]
  %s7 = inlined_call_operand.vmem [shape: f32[1,128], index: 7, kind: input, shape index: {}]
  %s8 = inlined_call_operand.vmem [shape: f32[1,128], index: 8, kind: input, shape index: {}]
  %s9 = inlined_call_operand.hbm [shape: bf16[128,128], index: 9, kind: input, shape index: {}]
  %s10 = inlined_call_operand.vmem [shape: f32[1,128], index: 10, kind: input, shape index: {}]
  %s11 = inlined_call_operand.hbm [shape: bf16[128,128], index: 11, kind: input, shape index: {}]
  %s12 = inlined_call_operand.vmem [shape: f32[1,128], index: 12, kind: input, shape index: {}]
  %s13 = inlined_call_operand.vmem [shape: f32[1,128], index: 13, kind: input, shape index: {}]
  %s14 = inlined_call_operand.vmem [shape: f32[1,128], index: 14, kind: input, shape index: {}]
  %s15 = inlined_call_operand.vmem [shape: bf16[128,32], index: 15, kind: input, shape index: {}]
  %s16 = inlined_call_operand.vmem [shape: f32[1,32], index: 16, kind: input, shape index: {}]
  %s17 = inlined_call_operand.hbm [shape: f32[2,8,32], index: 17, kind: output, shape index: {}]
  %s18 = sld [smem:[#allocation0]]
  $region117: #{tpu_custom_call.1} parent=0
    _
  %s20 = ssub.s32 1, %s18
  %s21 = scalar_select 0, %s20, %s18
  $region1: #{tpu_custom_call.1} parent=0
    #allocation2 [shape = 'u8[8192]{0}', space=vmem, size = 0x2000, scoped, tag = 'input window, operand 1, single buffered']
    #allocation3 [shape = 's32[2]{0}', space=sflag, size = 0x8, scoped, tag = 'scoped memory for tpu_custom_call.1']
    #allocation4 [shape = 's32[2]{0}', space=sflag, size = 0x8, scoped, tag = 'scoped memory for tpu_custom_call.1']
    #allocation5 [shape = 'u8[98304]{0}', space=vmem, size = 0x18000, scoped, tag = 'input window, operand 3, single buffered']
    #allocation6 [shape = 's32[1]{0}', space=sflag, size = 0x4, scoped, tag = 'scoped memory for tpu_custom_call.1']
    #allocation7 [shape = 'u8[32768]{0}', space=vmem, size = 0x8000, scoped, tag = 'input window, operand 9, single buffered']
    #allocation8 [shape = 'u8[32768]{0}', space=vmem, size = 0x8000, scoped, tag = 'input window, operand 11, single buffered']
    #allocation9 [shape = 's32[1]{0}', space=sflag, size = 0x4, scoped, tag = 'scoped memory for tpu_custom_call.1']
    #allocation10 [shape = 'u8[8192]{0}', space=vmem, size = 0x2000, scoped, tag = 'output window, operand 0']
    %22 = vsyncpa [#allocation3], 0
    %23 = vsyncpa [#allocation6], 0
    %24 = vsyncpa [#allocation9], 0
    %25 = vsyncpa [#allocation4], 0
    %s26 = scalar_lea.sflag [#allocation4], 1
    %27 = vsyncpa %s26, 0
    loop: start=0, step=1, limit=4
    $region2: #{tpu_custom_call.1} parent=1 // loop_pre_header
      _
    $region3: #{tpu_custom_call.1} parent=1 // loop_header
      %s29 = sphi 0, %s33
      %p30 = scmp.ge.s32.totalorder %s29, 4
      %s39 = sphi 0, %s41
      %s42 = sphi 0, %s39
      %s43 = sphi 0, %s42
      %s59 = sphi 0, %s43
      %s63 = sphi 0, %s63
      %s65 = sphi 0, %s63
      %s66 = sphi 0, %s65
      %s80 = sphi 0, %s66
      %s84 = sphi 0, %s84
      %s86 = sphi 0, %s84
      %s87 = sphi 0, %s86
      %s101 = sphi 0, %s87
      %s105 = sphi 0, %s105
      %s107 = sphi 0, %s105
      %s108 = sphi 0, %s107
      %s122 = sphi 0, %s108
      %s126 = sphi 0, %s126
      %s128 = sphi 0, %s126
      %s129 = sphi 0, %s128
      %s143 = sphi 0, %s129
      %s147 = sphi 0, %s147
      %s149 = sphi 0, %s147
      %s150 = sphi 0, %s149
      %s164 = sphi 0, %s150
      %s168 = sphi 0, %s168
      %s170 = sphi 0, %s168
      %s171 = sphi 0, %s170
      %s185 = sphi 0, %s171
      %s189 = sphi 0, %s189
      %s191 = sphi 0, %s189
      %s192 = sphi 0, %s191
      %s206 = sphi 0, %s192
      %s210 = sphi 0, %s210
      %s212 = sphi 0, %s210
      %s213 = sphi 0, %s212
      %s227 = sphi 0, %s213
      %s231 = sphi 0, %s231
      %s233 = sphi 0, %s231
      %s234 = sphi 0, %s233
      %s248 = sphi 0, %s234
      %s252 = sphi 0, %s252
      %s254 = sphi 0, %s252
      %s255 = sphi 0, %s254
      %s269 = sphi 0, %s255
      %s273 = sphi 0, %s273
      %s275 = sphi 0, %s273
      %s276 = sphi 0, %s275
      %s290 = sphi 0, %s276
      %s294 = sphi 0, %s294
      %s296 = sphi 0, %s294
      %s297 = sphi 0, %s296
      %s311 = sphi 0, %s297
      %s315 = sphi 0, %s315
      %s317 = sphi 0, %s315
      %s318 = sphi 0, %s317
      %s332 = sphi 0, %s318
      %s336 = sphi 0, %s336
      %s338 = sphi 0, %s336
      %s339 = sphi 0, %s338
      %s353 = sphi 0, %s339
      %s357 = sphi 0, %s357
      %s359 = sphi 0, %s357
      %s360 = sphi 0, %s359
      %s374 = sphi 0, %s360
      %s378 = sphi 0, %s378
      %s380 = sphi 0, %s378
      %s381 = sphi 0, %s380
      %s395 = sphi 0, %s381
      %s401 = sphi 0, %s403
      %s404 = sphi 0, %s401
      %s405 = sphi 0, %s404
      %s421 = sphi 0, %s405
    $region4: #{tpu_custom_call.1} parent=1 // loop_header_branch
      %32 = sbr.rel (%p30) target = $region8
    $region5: #{tpu_custom_call.1} parent=1 // loop_body
      %s34 = ssub.s32 %s29, 1
      %s35 = ssub.s32 %s29, 2
      %s36 = sadd.s32 %s29, 1
      %s37 = ssub.s32 %s29, %s36
      %p38 = scmp.eq.s32.totalorder %s37, 0
      %s40 = sadd.s32 %s39, 1
      %s41 = scalar_select %p38, %s39, %s40
      %p44 = pneg %p38
      %p45 = scmp.eq.s32.totalorder %s29, 1
      %p46 = por %p44, %p45
      %p47 = scmp.ne.s32.totalorder %s39, %s42
      %p48 = scmp.eq.s32.totalorder %s29, 0
      %p49 = por %p47, %p48
      %p50 = scmp.ne.s32.totalorder %s39, %s42
      %p51 = scmp.eq.s32.totalorder %s34, 1
      %p52 = por %p50, %p51
      %p53 = scmp.ne.s32.totalorder %s42, %s43
      %p54 = scmp.eq.s32.totalorder %s34, 0
      %p55 = por %p53, %p54
      %p56 = scmp.ne.s32.totalorder %s42, %s43
      %p57 = scmp.eq.s32.totalorder %s35, 1
      %p58 = por %p56, %p57
      %p60 = scmp.ne.s32.totalorder %s43, %s59
      %p61 = scmp.eq.s32.totalorder %s35, 0
      %p62 = por %p60, %p61
      %s64 = sadd.s32 %s63, 1
      %p67 = scmp.eq.s32.totalorder %s29, 1
      %p68 = scmp.ne.s32.totalorder %s63, %s65
      %p69 = scmp.eq.s32.totalorder %s29, 0
      %p70 = por %p68, %p69
      %p71 = scmp.ne.s32.totalorder %s63, %s65
      %p72 = scmp.eq.s32.totalorder %s34, 1
      %p73 = por %p71, %p72
      %p74 = scmp.ne.s32.totalorder %s65, %s66
      %p75 = scmp.eq.s32.totalorder %s34, 0
      %p76 = por %p74, %p75
      %p77 = scmp.ne.s32.totalorder %s65, %s66
      %p78 = scmp.eq.s32.totalorder %s35, 1
      %p79 = por %p77, %p78
      %p81 = scmp.ne.s32.totalorder %s66, %s80
      %p82 = scmp.eq.s32.totalorder %s35, 0
      %p83 = por %p81, %p82
      %s85 = sadd.s32 %s84, 1
      %p88 = scmp.eq.s32.totalorder %s29, 1
      %p89 = scmp.ne.s32.totalorder %s84, %s86
      %p90 = scmp.eq.s32.totalorder %s29, 0
      %p91 = por %p89, %p90
      %p92 = scmp.ne.s32.totalorder %s84, %s86
      %p93 = scmp.eq.s32.totalorder %s34, 1
      %p94 = por %p92, %p93
      %p95 = scmp.ne.s32.totalorder %s86, %s87
      %p96 = scmp.eq.s32.totalorder %s34, 0
      %p97 = por %p95, %p96
      %p98 = scmp.ne.s32.totalorder %s86, %s87
      %p99 = scmp.eq.s32.totalorder %s35, 1
      %p100 = por %p98, %p99
      %p102 = scmp.ne.s32.totalorder %s87, %s101
      %p103 = scmp.eq.s32.totalorder %s35, 0
      %p104 = por %p102, %p103
      %s106 = sadd.s32 %s105, 1
      %p109 = scmp.eq.s32.totalorder %s29, 1
      %p110 = scmp.ne.s32.totalorder %s105, %s107
      %p111 = scmp.eq.s32.totalorder %s29, 0
      %p112 = por %p110, %p111
      %p113 = scmp.ne.s32.totalorder %s105, %s107
      %p114 = scmp.eq.s32.totalorder %s34, 1
      %p115 = por %p113, %p114
      %p116 = scmp.ne.s32.totalorder %s107, %s108
      %p117 = scmp.eq.s32.totalorder %s34, 0
      %p118 = por %p116, %p117
      %p119 = scmp.ne.s32.totalorder %s107, %s108
      %p120 = scmp.eq.s32.totalorder %s35, 1
      %p121 = por %p119, %p120
      %p123 = scmp.ne.s32.totalorder %s108, %s122
      %p124 = scmp.eq.s32.totalorder %s35, 0
      %p125 = por %p123, %p124
      %s127 = sadd.s32 %s126, 1
      %p130 = scmp.eq.s32.totalorder %s29, 1
      %p131 = scmp.ne.s32.totalorder %s126, %s128
      %p132 = scmp.eq.s32.totalorder %s29, 0
      %p133 = por %p131, %p132
      %p134 = scmp.ne.s32.totalorder %s126, %s128
      %p135 = scmp.eq.s32.totalorder %s34, 1
      %p136 = por %p134, %p135
      %p137 = scmp.ne.s32.totalorder %s128, %s129
      %p138 = scmp.eq.s32.totalorder %s34, 0
      %p139 = por %p137, %p138
      %p140 = scmp.ne.s32.totalorder %s128, %s129
      %p141 = scmp.eq.s32.totalorder %s35, 1
      %p142 = por %p140, %p141
      %p144 = scmp.ne.s32.totalorder %s129, %s143
      %p145 = scmp.eq.s32.totalorder %s35, 0
      %p146 = por %p144, %p145
      %s148 = sadd.s32 %s147, 1
      %p151 = scmp.eq.s32.totalorder %s29, 1
      %p152 = scmp.ne.s32.totalorder %s147, %s149
      %p153 = scmp.eq.s32.totalorder %s29, 0
      %p154 = por %p152, %p153
      %p155 = scmp.ne.s32.totalorder %s147, %s149
      %p156 = scmp.eq.s32.totalorder %s34, 1
      %p157 = por %p155, %p156
      %p158 = scmp.ne.s32.totalorder %s149, %s150
      %p159 = scmp.eq.s32.totalorder %s34, 0
      %p160 = por %p158, %p159
      %p161 = scmp.ne.s32.totalorder %s149, %s150
      %p162 = scmp.eq.s32.totalorder %s35, 1
      %p163 = por %p161, %p162
      %p165 = scmp.ne.s32.totalorder %s150, %s164
      %p166 = scmp.eq.s32.totalorder %s35, 0
      %p167 = por %p165, %p166
      %s169 = sadd.s32 %s168, 1
      %p172 = scmp.eq.s32.totalorder %s29, 1
      %p173 = scmp.ne.s32.totalorder %s168, %s170
      %p174 = scmp.eq.s32.totalorder %s29, 0
      %p175 = por %p173, %p174
      %p176 = scmp.ne.s32.totalorder %s168, %s170
      %p177 = scmp.eq.s32.totalorder %s34, 1
      %p178 = por %p176, %p177
      %p179 = scmp.ne.s32.totalorder %s170, %s171
      %p180 = scmp.eq.s32.totalorder %s34, 0
      %p181 = por %p179, %p180
      %p182 = scmp.ne.s32.totalorder %s170, %s171
      %p183 = scmp.eq.s32.totalorder %s35, 1
      %p184 = por %p182, %p183
      %p186 = scmp.ne.s32.totalorder %s171, %s185
      %p187 = scmp.eq.s32.totalorder %s35, 0
      %p188 = por %p186, %p187
      %s190 = sadd.s32 %s189, 1
      %p193 = scmp.eq.s32.totalorder %s29, 1
      %p194 = scmp.ne.s32.totalorder %s189, %s191
      %p195 = scmp.eq.s32.totalorder %s29, 0
      %p196 = por %p194, %p195
      %p197 = scmp.ne.s32.totalorder %s189, %s191
      %p198 = scmp.eq.s32.totalorder %s34, 1
      %p199 = por %p197, %p198
      %p200 = scmp.ne.s32.totalorder %s191, %s192
      %p201 = scmp.eq.s32.totalorder %s34, 0
      %p202 = por %p200, %p201
      %p203 = scmp.ne.s32.totalorder %s191, %s192
      %p204 = scmp.eq.s32.totalorder %s35, 1
      %p205 = por %p203, %p204
      %p207 = scmp.ne.s32.totalorder %s192, %s206
      %p208 = scmp.eq.s32.totalorder %s35, 0
      %p209 = por %p207, %p208
      %s211 = sadd.s32 %s210, 1
      %p214 = scmp.eq.s32.totalorder %s29, 1
      %p215 = scmp.ne.s32.totalorder %s210, %s212
      %p216 = scmp.eq.s32.totalorder %s29, 0
      %p217 = por %p215, %p216
      %p218 = scmp.ne.s32.totalorder %s210, %s212
      %p219 = scmp.eq.s32.totalorder %s34, 1
      %p220 = por %p218, %p219
      %p221 = scmp.ne.s32.totalorder %s212, %s213
      %p222 = scmp.eq.s32.totalorder %s34, 0
      %p223 = por %p221, %p222
      %p224 = scmp.ne.s32.totalorder %s212, %s213
      %p225 = scmp.eq.s32.totalorder %s35, 1
      %p226 = por %p224, %p225
      %p228 = scmp.ne.s32.totalorder %s213, %s227
      %p229 = scmp.eq.s32.totalorder %s35, 0
      %p230 = por %p228, %p229
      %s232 = sadd.s32 %s231, 1
      %p235 = scmp.eq.s32.totalorder %s29, 1
      %p236 = scmp.ne.s32.totalorder %s231, %s233
      %p237 = scmp.eq.s32.totalorder %s29, 0
      %p238 = por %p236, %p237
      %p239 = scmp.ne.s32.totalorder %s231, %s233
      %p240 = scmp.eq.s32.totalorder %s34, 1
      %p241 = por %p239, %p240
      %p242 = scmp.ne.s32.totalorder %s233, %s234
      %p243 = scmp.eq.s32.totalorder %s34, 0
      %p244 = por %p242, %p243
      %p245 = scmp.ne.s32.totalorder %s233, %s234
      %p246 = scmp.eq.s32.totalorder %s35, 1
      %p247 = por %p245, %p246
      %p249 = scmp.ne.s32.totalorder %s234, %s248
      %p250 = scmp.eq.s32.totalorder %s35, 0
      %p251 = por %p249, %p250
      %s253 = sadd.s32 %s252, 1
      %p256 = scmp.eq.s32.totalorder %s29, 1
      %p257 = scmp.ne.s32.totalorder %s252, %s254
      %p258 = scmp.eq.s32.totalorder %s29, 0
      %p259 = por %p257, %p258
      %p260 = scmp.ne.s32.totalorder %s252, %s254
      %p261 = scmp.eq.s32.totalorder %s34, 1
      %p262 = por %p260, %p261
      %p263 = scmp.ne.s32.totalorder %s254, %s255
      %p264 = scmp.eq.s32.totalorder %s34, 0
      %p265 = por %p263, %p264
      %p266 = scmp.ne.s32.totalorder %s254, %s255
      %p267 = scmp.eq.s32.totalorder %s35, 1
      %p268 = por %p266, %p267
      %p270 = scmp.ne.s32.totalorder %s255, %s269
      %p271 = scmp.eq.s32.totalorder %s35, 0
      %p272 = por %p270, %p271
      %s274 = sadd.s32 %s273, 1
      %p277 = scmp.eq.s32.totalorder %s29, 1
      %p278 = scmp.ne.s32.totalorder %s273, %s275
      %p279 = scmp.eq.s32.totalorder %s29, 0
      %p280 = por %p278, %p279
      %p281 = scmp.ne.s32.totalorder %s273, %s275
      %p282 = scmp.eq.s32.totalorder %s34, 1
      %p283 = por %p281, %p282
      %p284 = scmp.ne.s32.totalorder %s275, %s276
      %p285 = scmp.eq.s32.totalorder %s34, 0
      %p286 = por %p284, %p285
      %p287 = scmp.ne.s32.totalorder %s275, %s276
      %p288 = scmp.eq.s32.totalorder %s35, 1
      %p289 = por %p287, %p288
      %p291 = scmp.ne.s32.totalorder %s276, %s290
      %p292 = scmp.eq.s32.totalorder %s35, 0
      %p293 = por %p291, %p292
      %s295 = sadd.s32 %s294, 1
      %p298 = scmp.eq.s32.totalorder %s29, 1
      %p299 = scmp.ne.s32.totalorder %s294, %s296
      %p300 = scmp.eq.s32.totalorder %s29, 0
      %p301 = por %p299, %p300
      %p302 = scmp.ne.s32.totalorder %s294, %s296
      %p303 = scmp.eq.s32.totalorder %s34, 1
      %p304 = por %p302, %p303
      %p305 = scmp.ne.s32.totalorder %s296, %s297
      %p306 = scmp.eq.s32.totalorder %s34, 0
      %p307 = por %p305, %p306
      %p308 = scmp.ne.s32.totalorder %s296, %s297
      %p309 = scmp.eq.s32.totalorder %s35, 1
      %p310 = por %p308, %p309
      %p312 = scmp.ne.s32.totalorder %s297, %s311
      %p313 = scmp.eq.s32.totalorder %s35, 0
      %p314 = por %p312, %p313
      %s316 = sadd.s32 %s315, 1
      %p319 = scmp.eq.s32.totalorder %s29, 1
      %p320 = scmp.ne.s32.totalorder %s315, %s317
      %p321 = scmp.eq.s32.totalorder %s29, 0
      %p322 = por %p320, %p321
      %p323 = scmp.ne.s32.totalorder %s315, %s317
      %p324 = scmp.eq.s32.totalorder %s34, 1
      %p325 = por %p323, %p324
      %p326 = scmp.ne.s32.totalorder %s317, %s318
      %p327 = scmp.eq.s32.totalorder %s34, 0
      %p328 = por %p326, %p327
      %p329 = scmp.ne.s32.totalorder %s317, %s318
      %p330 = scmp.eq.s32.totalorder %s35, 1
      %p331 = por %p329, %p330
      %p333 = scmp.ne.s32.totalorder %s318, %s332
      %p334 = scmp.eq.s32.totalorder %s35, 0
      %p335 = por %p333, %p334
      %s337 = sadd.s32 %s336, 1
      %p340 = scmp.eq.s32.totalorder %s29, 1
      %p341 = scmp.ne.s32.totalorder %s336, %s338
      %p342 = scmp.eq.s32.totalorder %s29, 0
      %p343 = por %p341, %p342
      %p344 = scmp.ne.s32.totalorder %s336, %s338
      %p345 = scmp.eq.s32.totalorder %s34, 1
      %p346 = por %p344, %p345
      %p347 = scmp.ne.s32.totalorder %s338, %s339
      %p348 = scmp.eq.s32.totalorder %s34, 0
      %p349 = por %p347, %p348
      %p350 = scmp.ne.s32.totalorder %s338, %s339
      %p351 = scmp.eq.s32.totalorder %s35, 1
      %p352 = por %p350, %p351
      %p354 = scmp.ne.s32.totalorder %s339, %s353
      %p355 = scmp.eq.s32.totalorder %s35, 0
      %p356 = por %p354, %p355
      %s358 = sadd.s32 %s357, 1
      %p361 = scmp.eq.s32.totalorder %s29, 1
      %p362 = scmp.ne.s32.totalorder %s357, %s359
      %p363 = scmp.eq.s32.totalorder %s29, 0
      %p364 = por %p362, %p363
      %p365 = scmp.ne.s32.totalorder %s357, %s359
      %p366 = scmp.eq.s32.totalorder %s34, 1
      %p367 = por %p365, %p366
      %p368 = scmp.ne.s32.totalorder %s359, %s360
      %p369 = scmp.eq.s32.totalorder %s34, 0
      %p370 = por %p368, %p369
      %p371 = scmp.ne.s32.totalorder %s359, %s360
      %p372 = scmp.eq.s32.totalorder %s35, 1
      %p373 = por %p371, %p372
      %p375 = scmp.ne.s32.totalorder %s360, %s374
      %p376 = scmp.eq.s32.totalorder %s35, 0
      %p377 = por %p375, %p376
      %s379 = sadd.s32 %s378, 1
      %p382 = scmp.eq.s32.totalorder %s29, 1
      %p383 = scmp.ne.s32.totalorder %s378, %s380
      %p384 = scmp.eq.s32.totalorder %s29, 0
      %p385 = por %p383, %p384
      %p386 = scmp.ne.s32.totalorder %s378, %s380
      %p387 = scmp.eq.s32.totalorder %s34, 1
      %p388 = por %p386, %p387
      %p389 = scmp.ne.s32.totalorder %s380, %s381
      %p390 = scmp.eq.s32.totalorder %s34, 0
      %p391 = por %p389, %p390
      %p392 = scmp.ne.s32.totalorder %s380, %s381
      %p393 = scmp.eq.s32.totalorder %s35, 1
      %p394 = por %p392, %p393
      %p396 = scmp.ne.s32.totalorder %s381, %s395
      %p397 = scmp.eq.s32.totalorder %s35, 0
      %p398 = por %p396, %p397
      %s399 = ssub.s32 %s29, %s36
      %p400 = scmp.eq.s32.totalorder %s399, 0
      %s402 = sadd.s32 %s401, 1
      %s403 = scalar_select %p400, %s401, %s402
      %p406 = pneg %p400
      %p407 = scmp.eq.s32.totalorder %s29, 1
      %p408 = por %p406, %p407
      %p409 = scmp.ne.s32.totalorder %s401, %s404
      %p410 = scmp.eq.s32.totalorder %s29, 0
      %p411 = por %p409, %p410
      %p412 = scmp.ne.s32.totalorder %s401, %s404
      %p413 = scmp.eq.s32.totalorder %s34, 1
      %p414 = por %p412, %p413
      %p415 = scmp.ne.s32.totalorder %s404, %s405
      %p416 = scmp.eq.s32.totalorder %s34, 0
      %p417 = por %p415, %p416
      %p418 = scmp.ne.s32.totalorder %s404, %s405
      %p419 = scmp.eq.s32.totalorder %s35, 1
      %p420 = por %p418, %p419
      %p422 = scmp.ne.s32.totalorder %s405, %s421
      %p423 = scmp.eq.s32.totalorder %s35, 0
      %p424 = por %p422, %p423
      %p425 = scmp.le.s32.totalorder 1, %s29
      %p426 = scmp.lt.s32.totalorder %s29, 3
      %p427 = pnand %p425, %p426
      %p428 = pneg %p427
      // Predicated region
      $region9: #{tpu_custom_call.1} parent=5 // pred_check
        _
      $region10: #{tpu_custom_call.1} parent=5 // pred_check_branch
        %430 = sbr.rel (%p427) target = $region12
      $region11: #{tpu_custom_call.1} parent=5 // pred_region
        %s431 = ssub.s32 %s29, 1
        // Predicated region
        $region13: #{tpu_custom_call.1} parent=11 // pred_check
          %p432 = pneg %p76
        $region14: #{tpu_custom_call.1} parent=11 // pred_check_branch
          %434 = sbr.rel (%p432) target = $region16
        $region15: #{tpu_custom_call.1} parent=11 // pred_region
          %s436 = ssub.s32 256, 256
          %437 = vsyncadd [#allocation3], %s436
          %s438 = sshll.u32 [#allocation2], 4
          %s439 = int_to_ptr.vmem [resolvable:$true] %s438
          %444 = dma.hbm_to_vmem [thread:$0]  %s1, 256, %s439, [#allocation3], 64, 64, 4
        $region16: #{tpu_custom_call.1} parent=11 // pred_fallthru
          _
        // Predicated region
        $region17: #{tpu_custom_call.1} parent=11 // pred_check
          %p445 = pneg %p97
        $region18: #{tpu_custom_call.1} parent=11 // pred_check_branch
          %447 = sbr.rel (%p445) target = $region20
        $region19: #{tpu_custom_call.1} parent=11 // pred_region
          _
        $region20: #{tpu_custom_call.1} parent=11 // pred_fallthru
          _
        // Predicated region
        $region21: #{tpu_custom_call.1} parent=11 // pred_check
          %p448 = pneg %p118
        $region22: #{tpu_custom_call.1} parent=11 // pred_check_branch
          %450 = sbr.rel (%p448) target = $region24
        $region23: #{tpu_custom_call.1} parent=11 // pred_region
          %s452 = ssub.s32 3072, 3072
          %453 = vsyncadd [#allocation6], %s452
          %s454 = sshll.u32 [#allocation5], 4
          %s455 = int_to_ptr.vmem [resolvable:$true] %s454
          %460 = dma.hbm_to_vmem [thread:$0]  %s3, 3072, %s455, [#allocation6], 192, 192, 12
        $region24: #{tpu_custom_call.1} parent=11 // pred_fallthru
          _
        // Predicated region
        $region25: #{tpu_custom_call.1} parent=11 // pred_check
          %p461 = pneg %p139
        $region26: #{tpu_custom_call.1} parent=11 // pred_check_branch
          %463 = sbr.rel (%p461) target = $region28
        $region27: #{tpu_custom_call.1} parent=11 // pred_region
          _
        $region28: #{tpu_custom_call.1} parent=11 // pred_fallthru
          _
        // Predicated region
        $region29: #{tpu_custom_call.1} parent=11 // pred_check
          %p464 = pneg %p160
        $region30: #{tpu_custom_call.1} parent=11 // pred_check_branch
          %466 = sbr.rel (%p464) target = $region32
        $region31: #{tpu_custom_call.1} parent=11 // pred_region
          _
        $region32: #{tpu_custom_call.1} parent=11 // pred_fallthru
          _
        // Predicated region
        $region33: #{tpu_custom_call.1} parent=11 // pred_check
          %p467 = pneg %p181
        $region34: #{tpu_custom_call.1} parent=11 // pred_check_branch
          %469 = sbr.rel (%p467) target = $region36
        $region35: #{tpu_custom_call.1} parent=11 // pred_region
          _
        $region36: #{tpu_custom_call.1} parent=11 // pred_fallthru
          _
        // Predicated region
        $region37: #{tpu_custom_call.1} parent=11 // pred_check
          %p470 = pneg %p202
        $region38: #{tpu_custom_call.1} parent=11 // pred_check_branch
          %472 = sbr.rel (%p470) target = $region40
        $region39: #{tpu_custom_call.1} parent=11 // pred_region
          _
        $region40: #{tpu_custom_call.1} parent=11 // pred_fallthru
          _
        // Predicated region
        $region41: #{tpu_custom_call.1} parent=11 // pred_check
          %p473 = pneg %p223
        $region42: #{tpu_custom_call.1} parent=11 // pred_check_branch
          %475 = sbr.rel (%p473) target = $region44
        $region43: #{tpu_custom_call.1} parent=11 // pred_region
          _
        $region44: #{tpu_custom_call.1} parent=11 // pred_fallthru
          _
        // Predicated region
        $region45: #{tpu_custom_call.1} parent=11 // pred_check
          %p476 = pneg %p244
        $region46: #{tpu_custom_call.1} parent=11 // pred_check_branch
          %478 = sbr.rel (%p476) target = $region48
        $region47: #{tpu_custom_call.1} parent=11 // pred_region
          %s480 = ssub.s32 1024, 1024
          %481 = vsyncadd [#allocation6], %s480
          %s482 = sshll.u32 [#allocation7], 4
          %s483 = int_to_ptr.vmem [resolvable:$true] %s482
          %488 = dma.hbm_to_vmem [thread:$0]  %s9, 1024, %s483, [#allocation6], 64, 64, 4
        $region48: #{tpu_custom_call.1} parent=11 // pred_fallthru
          _
        // Predicated region
        $region49: #{tpu_custom_call.1} parent=11 // pred_check
          %p489 = pneg %p265
        $region50: #{tpu_custom_call.1} parent=11 // pred_check_branch
          %491 = sbr.rel (%p489) target = $region52
        $region51: #{tpu_custom_call.1} parent=11 // pred_region
          _
        $region52: #{tpu_custom_call.1} parent=11 // pred_fallthru
          _
        // Predicated region
        $region53: #{tpu_custom_call.1} parent=11 // pred_check
          %p492 = pneg %p286
        $region54: #{tpu_custom_call.1} parent=11 // pred_check_branch
          %494 = sbr.rel (%p492) target = $region56
        $region55: #{tpu_custom_call.1} parent=11 // pred_region
          %s496 = ssub.s32 1024, 1024
          %497 = vsyncadd [#allocation9], %s496
          %s498 = sshll.u32 [#allocation8], 4
          %s499 = int_to_ptr.vmem [resolvable:$true] %s498
          %504 = dma.hbm_to_vmem [thread:$0]  %s11, 1024, %s499, [#allocation9], 64, 64, 4
        $region56: #{tpu_custom_call.1} parent=11 // pred_fallthru
          _
        // Predicated region
        $region57: #{tpu_custom_call.1} parent=11 // pred_check
          %p505 = pneg %p307
        $region58: #{tpu_custom_call.1} parent=11 // pred_check_branch
          %507 = sbr.rel (%p505) target = $region60
        $region59: #{tpu_custom_call.1} parent=11 // pred_region
          _
        $region60: #{tpu_custom_call.1} parent=11 // pred_fallthru
          _
        // Predicated region
        $region61: #{tpu_custom_call.1} parent=11 // pred_check
          %p508 = pneg %p328
        $region62: #{tpu_custom_call.1} parent=11 // pred_check_branch
          %510 = sbr.rel (%p508) target = $region64
        $region63: #{tpu_custom_call.1} parent=11 // pred_region
          _
        $region64: #{tpu_custom_call.1} parent=11 // pred_fallthru
          _
        // Predicated region
        $region65: #{tpu_custom_call.1} parent=11 // pred_check
          %p511 = pneg %p349
        $region66: #{tpu_custom_call.1} parent=11 // pred_check_branch
          %513 = sbr.rel (%p511) target = $region68
        $region67: #{tpu_custom_call.1} parent=11 // pred_region
          _
        $region68: #{tpu_custom_call.1} parent=11 // pred_fallthru
          _
        // Predicated region
        $region69: #{tpu_custom_call.1} parent=11 // pred_check
          %p514 = pneg %p370
        $region70: #{tpu_custom_call.1} parent=11 // pred_check_branch
          %516 = sbr.rel (%p514) target = $region72
        $region71: #{tpu_custom_call.1} parent=11 // pred_region
          _
        $region72: #{tpu_custom_call.1} parent=11 // pred_fallthru
          _
        // Predicated region
        $region73: #{tpu_custom_call.1} parent=11 // pred_check
          %p517 = pneg %p391
        $region74: #{tpu_custom_call.1} parent=11 // pred_check_branch
          %519 = sbr.rel (%p517) target = $region76
        $region75: #{tpu_custom_call.1} parent=11 // pred_region
          _
        $region76: #{tpu_custom_call.1} parent=11 // pred_fallthru
          _
      $region12: #{tpu_custom_call.1} parent=5 // pred_fallthru
        _
      %p520 = scmp.lt.s32.totalorder %s29, 2
      // Predicated region
      $region77: #{tpu_custom_call.1} parent=5 // pred_check
        %p521 = pneg %p520
      $region78: #{tpu_custom_call.1} parent=5 // pred_check_branch
        %523 = sbr.rel (%p521) target = $region80
      $region79: #{tpu_custom_call.1} parent=5 // pred_region
        // Predicated region
        $region81: #{tpu_custom_call.1} parent=79 // pred_check
          %p524 = pneg %p49
        $region82: #{tpu_custom_call.1} parent=79 // pred_check_branch
          %526 = sbr.rel (%p524) target = $region84
        $region83: #{tpu_custom_call.1} parent=79 // pred_region
          %p527 = scmp.lt.s32.totalorder %s29, 1
          %s528 = scalar_select %p527, %s29, 1
          %s529 = smul.addr %s528, 8
          %s530 = scalar_lea.vmem %s0, %s529
        $region84: #{tpu_custom_call.1} parent=79 // pred_fallthru
          _
      $region80: #{tpu_custom_call.1} parent=5 // pred_fallthru
        _
      %p531 = scmp.le.s32.totalorder 1, %s29
      %p532 = scmp.lt.s32.totalorder %s29, 3
      %p533 = pnand %p531, %p532
      %p534 = pneg %p533
      // Predicated region
      $region85: #{tpu_custom_call.1} parent=5 // pred_check
        _
      $region86: #{tpu_custom_call.1} parent=5 // pred_check_branch
        %536 = sbr.rel (%p533) target = $region88
      $region87: #{tpu_custom_call.1} parent=5 // pred_region
        %s537 = ssub.s32 %s29, 1
        // Predicated region
        $region89: #{tpu_custom_call.1} parent=87 // pred_check
          %p538 = pneg %p76
        $region90: #{tpu_custom_call.1} parent=87 // pred_check_branch
          %540 = sbr.rel (%p538) target = $region92
        $region91: #{tpu_custom_call.1} parent=87 // pred_region
          %541 = dma.done [#allocation3], 256
        $region92: #{tpu_custom_call.1} parent=87 // pred_fallthru
          _
        // Predicated region
        $region93: #{tpu_custom_call.1} parent=87 // pred_check
          %p542 = pneg %p118
        $region94: #{tpu_custom_call.1} parent=87 // pred_check_branch
          %544 = sbr.rel (%p542) target = $region96
        $region95: #{tpu_custom_call.1} parent=87 // pred_region
          %545 = dma.done [#allocation6], 3072
        $region96: #{tpu_custom_call.1} parent=87 // pred_fallthru
          _
        // Predicated region
        $region97: #{tpu_custom_call.1} parent=87 // pred_check
          %p546 = pneg %p244
        $region98: #{tpu_custom_call.1} parent=87 // pred_check_branch
          %548 = sbr.rel (%p546) target = $region100
        $region99: #{tpu_custom_call.1} parent=87 // pred_region
          %549 = dma.done [#allocation6], 1024
        $region100: #{tpu_custom_call.1} parent=87 // pred_fallthru
          _
        // Predicated region
        $region101: #{tpu_custom_call.1} parent=87 // pred_check
          %p550 = pneg %p286
        $region102: #{tpu_custom_call.1} parent=87 // pred_check_branch
          %552 = sbr.rel (%p550) target = $region104
        $region103: #{tpu_custom_call.1} parent=87 // pred_region
          %553 = dma.done [#allocation9], 1024
        $region104: #{tpu_custom_call.1} parent=87 // pred_fallthru
          _
        %p554 = scmp.lt.s32.totalorder %s34, 1
        %s555 = scalar_select %p554, %s34, 1
        %s556 = smul.addr %s555, 8
        %s557 = scalar_lea.vmem %s0, %s556
        %p558 = pneg %p55
        %p559 = pneg %p52
        %p560 = pneg %p76
        %p561 = pneg %p73
        %p562 = pneg %p97
        %p563 = pneg %p94
        %p564 = pneg %p118
        %p565 = pneg %p115
        %p566 = pneg %p139
        %p567 = pneg %p136
        %p568 = pneg %p160
        %p569 = pneg %p157
        %p570 = pneg %p181
        %p571 = pneg %p178
        %p572 = pneg %p202
        %p573 = pneg %p199
        %p574 = pneg %p223
        %p575 = pneg %p220
        %p576 = pneg %p244
        %p577 = pneg %p241
        %p578 = pneg %p265
        %p579 = pneg %p262
        %p580 = pneg %p286
        %p581 = pneg %p283
        %p582 = pneg %p307
        %p583 = pneg %p304
        %p584 = pneg %p328
        %p585 = pneg %p325
        %p586 = pneg %p349
        %p587 = pneg %p346
        %p588 = pneg %p370
        %p589 = pneg %p367
        %p590 = pneg %p391
        %p591 = pneg %p388
        %p592 = pneg %p417
        %p593 = pneg %p414
        %s594 = sand.u32 %s404, 1
        %s595 = scalar_lea.sflag [#allocation4], %s594
        %s596 = sand.u32 %s404, 1
        %s597 = smul.addr %s596, 8
        %s598 = scalar_lea.vmem [#allocation10], %s597
        %p599 = scmp.lt.s32.totalorder %s34, 1
        %s600 = scalar_select %p599, %s34, 1
        %s601 = smul.addr %s600, 8
        %s602 = scalar_lea.vmem %s0, %s601
        %v604 = vlaneseq
        %v605 = vand.u32 %v604, 127
        %vm606 = vcmp.lt.s32.totalorder %v605, 32
        %v607 = vld [vmem:[%s602] sm:$0xff]
        %v608 = vpack.c.bf16 %v607, %v607
        %v609 = vld [vmem:[#allocation2] sm:$0xf]
        %v610 = vld [vmem:[#allocation2 + $0x4] sm:$0xf]
        %v611 = vld [vmem:[#allocation2 + $0x8] sm:$0xf]
        %v612 = vld [vmem:[#allocation2 + $0xc] sm:$0xf]
        %v613 = vld [vmem:[%s2] sm:$0x1]
        %v615 = vlaneseq
        %v616 = vshrl.u32 %v615, 7
        %v617 = vsub.s32 0, %v616
        %v618 = vrot.slane %v613, %v617
        %v624 = vunpack.c.l.b16 %v609
        %v625 = vunpack.c.l.b16 %v610
        %v626 = vunpack.c.l.b16 %v611
        %v627 = vunpack.c.l.b16 %v612
        %v628 = vpack.c.b16 %v625, %v624
        %v629 = vpack.c.b16 %v627, %v626
        %vm632 = vcmask 261120
        %v634 = vsel %vm632, %v608, 0
        %636 = vmatprep.subr.bf16.mxu0 0
        %637 = vmatpush1.bf16.msra.mxu0 %v628
        %638 = vmatprep.subr.bf16.mxu0 0
        %639 = vmatpush1.bf16.msra.mxu0 %v629
        %640 = vmatprep.subr.bf16.mxu0 0
        %641 = vmatpush1.bf16.msra.mxu0 0
        %642 = vmatprep.subr.bf16.mxu0 0
        %643 = vmatpush1.bf16.msra.mxu0 0
        %644 = vmatprep.subr.bf16.mxu0 0
        %645 = vmatpush1.bf16.msra.mxu0 0
        %646 = vmatprep.subr.bf16.mxu0 0
        %647 = vmatpush1.bf16.msra.mxu0 0
        %648 = vmatprep.subr.bf16.mxu0 0
        %649 = vmatpush1.bf16.msra.mxu0 0
        %650 = vmatprep.subr.bf16.mxu0 0
        %651 = vmatpush1.bf16.msra.mxu0 0
        %652 = vmatprep.subr.bf16.mxu0 0
        %653 = vmatpush1.bf16.msra.mxu0 0
        %654 = vmatprep.subr.bf16.mxu0 0
        %655 = vmatpush1.bf16.msra.mxu0 0
        %656 = vmatprep.subr.bf16.mxu0 0
        %657 = vmatpush1.bf16.msra.mxu0 0
        %658 = vmatprep.subr.bf16.mxu0 0
        %659 = vmatpush1.bf16.msra.mxu0 0
        %660 = vmatprep.subr.bf16.mxu0 0
        %661 = vmatpush1.bf16.msra.mxu0 0
        %662 = vmatprep.subr.bf16.mxu0 0
        %663 = vmatpush1.bf16.msra.mxu0 0
        %664 = vmatprep.subr.bf16.mxu0 0
        %665 = vmatpush1.bf16.msra.mxu0 0
        %666 = vmatprep.subr.bf16.mxu0 0
        %667 = vmatpush1.bf16.msra.mxu0 0
        %668 = vmatprep.mubr.bf16.mxu0 0
        %669 = vmatmul.mubr.bf16.gmra.mrb[0].mxu0 %v634
        %v670 = vpop.f32.mrb[0].mxu0
        %v671 = vadd.f32 %v618, %v670
        %v672 = vpop.f32.mrb[0].mxu0
        %v673 = vpop.f32.mrb[0].mxu0
        %v674 = vpop.f32.mrb[0].mxu0
        %675 = vdwg.mxu0
        %v676 = vpack.c.bf16 %v671, %v671
        %v677 = vld [vmem:[#allocation5] sm:$0xff]
        %v678 = vld [vmem:[#allocation5 + $0x8] sm:$0xf]
        %v679 = vld [vmem:[#allocation5 + $0xc] sm:$0xff]
        %v680 = vld [vmem:[#allocation5 + $0x14] sm:$0xf]
        %v681 = vld [vmem:[#allocation5 + $0x18] sm:$0xff]
        %v682 = vld [vmem:[#allocation5 + $0x20] sm:$0xf]
        %v683 = vld [vmem:[#allocation5 + $0x24] sm:$0xff]
        %v684 = vld [vmem:[#allocation5 + $0x2c] sm:$0xf]
        %v685 = vld [vmem:[#allocation5 + $0x30] sm:$0xff]
        %v686 = vld [vmem:[#allocation5 + $0x38] sm:$0xf]
        %v687 = vld [vmem:[#allocation5 + $0x3c] sm:$0xff]
        %v688 = vld [vmem:[#allocation5 + $0x44] sm:$0xf]
        %v689 = vld [vmem:[#allocation5 + $0x48] sm:$0xff]
        %v690 = vld [vmem:[#allocation5 + $0x50] sm:$0xf]
        %v691 = vld [vmem:[#allocation5 + $0x54] sm:$0xff]
        %v692 = vld [vmem:[#allocation5 + $0x5c] sm:$0xf]
        %v693 = vld [vmem:[#allocation5 + $0x60] sm:$0xff]
        %v694 = vld [vmem:[#allocation5 + $0x68] sm:$0xf]
        %v695 = vld [vmem:[#allocation5 + $0x6c] sm:$0xff]
        %v696 = vld [vmem:[#allocation5 + $0x74] sm:$0xf]
        %v697 = vld [vmem:[#allocation5 + $0x78] sm:$0xff]
        %v698 = vld [vmem:[#allocation5 + $0x80] sm:$0xf]
        %v699 = vld [vmem:[#allocation5 + $0x84] sm:$0xff]
        %v700 = vld [vmem:[#allocation5 + $0x8c] sm:$0xf]
        %v701 = vld [vmem:[#allocation5 + $0x90] sm:$0xff]
        %v702 = vld [vmem:[#allocation5 + $0x98] sm:$0xf]
        %v703 = vld [vmem:[#allocation5 + $0x9c] sm:$0xff]
        %v704 = vld [vmem:[#allocation5 + $0xa4] sm:$0xf]
        %v705 = vld [vmem:[#allocation5 + $0xa8] sm:$0xff]
        %v706 = vld [vmem:[#allocation5 + $0xb0] sm:$0xf]
        %v707 = vld [vmem:[#allocation5 + $0xb4] sm:$0xff]
        %v708 = vld [vmem:[#allocation5 + $0xbc] sm:$0xf]
        %v709 = vld [vmem:[%s4] sm:$0x7]
        %v711 = vlaneseq
        %v712 = vshrl.u32 %v711, 7
        %v713 = vsub.s32 0, %v712
        %v714 = vrot.slane %v709, %v713
        %v715 = vlaneseq
        %v716 = vshrl.u32 %v715, 7
        %v717 = vsub.s32 1, %v716
        %v718 = vrot.slane %v709, %v717
        %v719 = vlaneseq
        %v720 = vshrl.u32 %v719, 7
        %v721 = vsub.s32 2, %v720
        %v722 = vrot.slane %v709, %v721
        %v758 = vunpack.c.l.b16 %v677
        %v759 = vunpack.c.h.b16 %v677
        %v760 = vunpack.c.l.b16 %v678
        %v761 = vunpack.c.l.b16 %v679
        %v762 = vunpack.c.h.b16 %v679
        %v763 = vunpack.c.l.b16 %v680
        %v764 = vunpack.c.l.b16 %v681
        %v765 = vunpack.c.h.b16 %v681
        %v766 = vunpack.c.l.b16 %v682
        %v767 = vunpack.c.l.b16 %v683
        %v768 = vunpack.c.h.b16 %v683
        %v769 = vunpack.c.l.b16 %v684
        %v770 = vunpack.c.l.b16 %v685
        %v771 = vunpack.c.h.b16 %v685
        %v772 = vunpack.c.l.b16 %v686
        %v773 = vunpack.c.l.b16 %v687
        %v774 = vunpack.c.h.b16 %v687
        %v775 = vunpack.c.l.b16 %v688
        %v776 = vunpack.c.l.b16 %v689
        %v777 = vunpack.c.h.b16 %v689
        %v778 = vunpack.c.l.b16 %v690
        %v779 = vunpack.c.l.b16 %v691
        %v780 = vunpack.c.h.b16 %v691
        %v781 = vunpack.c.l.b16 %v692
        %v782 = vunpack.c.l.b16 %v693
        %v783 = vunpack.c.h.b16 %v693
        %v784 = vunpack.c.l.b16 %v694
        %v785 = vunpack.c.l.b16 %v695
        %v786 = vunpack.c.h.b16 %v695
        %v787 = vunpack.c.l.b16 %v696
        %v788 = vunpack.c.l.b16 %v697
        %v789 = vunpack.c.h.b16 %v697
        %v790 = vunpack.c.l.b16 %v698
        %v791 = vunpack.c.l.b16 %v699
        %v792 = vunpack.c.h.b16 %v699
        %v793 = vunpack.c.l.b16 %v700
        %v794 = vunpack.c.l.b16 %v701
        %v795 = vunpack.c.h.b16 %v701
        %v796 = vunpack.c.l.b16 %v702
        %v797 = vunpack.c.l.b16 %v703
        %v798 = vunpack.c.h.b16 %v703
        %v799 = vunpack.c.l.b16 %v704
        %v800 = vunpack.c.l.b16 %v705
        %v801 = vunpack.c.h.b16 %v705
        %v802 = vunpack.c.l.b16 %v706
        %v803 = vunpack.c.l.b16 %v707
        %v804 = vunpack.c.h.b16 %v707
        %v805 = vunpack.c.l.b16 %v708
        %v806 = vpack.c.b16 %v761, %v758
        %v807 = vpack.c.b16 %v762, %v759
        %v808 = vpack.c.b16 %v763, %v760
        %v809 = vpack.c.b16 %v767, %v764
        %v810 = vpack.c.b16 %v768, %v765
        %v811 = vpack.c.b16 %v769, %v766
        %v812 = vpack.c.b16 %v773, %v770
        %v813 = vpack.c.b16 %v774, %v771
        %v814 = vpack.c.b16 %v775, %v772
        %v815 = vpack.c.b16 %v779, %v776
        %v816 = vpack.c.b16 %v780, %v777
        %v817 = vpack.c.b16 %v781, %v778
        %v818 = vpack.c.b16 %v785, %v782
        %v819 = vpack.c.b16 %v786, %v783
        %v820 = vpack.c.b16 %v787, %v784
        %v821 = vpack.c.b16 %v791, %v788
        %v822 = vpack.c.b16 %v792, %v789
        %v823 = vpack.c.b16 %v793, %v790
        %v824 = vpack.c.b16 %v797, %v794
        %v825 = vpack.c.b16 %v798, %v795
        %v826 = vpack.c.b16 %v799, %v796
        %v827 = vpack.c.b16 %v803, %v800
        %v828 = vpack.c.b16 %v804, %v801
        %v829 = vpack.c.b16 %v805, %v802
        %854 = vmatprep.subr.bf16.mxu0 %v807
        %855 = vmatpush1.bf16.msra.mxu0 %v806
        %856 = vmatprep.subr.bf16.mxu0 %v810
        %857 = vmatpush1.bf16.msra.mxu0 %v809
        %858 = vmatprep.subr.bf16.mxu0 %v813
        %859 = vmatpush1.bf16.msra.mxu0 %v812
        %860 = vmatprep.subr.bf16.mxu0 %v816
        %861 = vmatpush1.bf16.msra.mxu0 %v815
        %862 = vmatprep.subr.bf16.mxu0 %v819
        %863 = vmatpush1.bf16.msra.mxu0 %v818
        %864 = vmatprep.subr.bf16.mxu0 %v822
        %865 = vmatpush1.bf16.msra.mxu0 %v821
        %866 = vmatprep.subr.bf16.mxu0 %v825
        %867 = vmatpush1.bf16.msra.mxu0 %v824
        %868 = vmatprep.subr.bf16.mxu0 %v828
        %869 = vmatpush1.bf16.msra.mxu0 %v827
        %870 = vmatprep.subr.bf16.mxu0 0
        %871 = vmatpush1.bf16.msra.mxu0 0
        %872 = vmatprep.subr.bf16.mxu0 0
        %873 = vmatpush1.bf16.msra.mxu0 0
        %874 = vmatprep.subr.bf16.mxu0 0
        %875 = vmatpush1.bf16.msra.mxu0 0
        %876 = vmatprep.subr.bf16.mxu0 0
        %877 = vmatpush1.bf16.msra.mxu0 0
        %878 = vmatprep.subr.bf16.mxu0 0
        %879 = vmatpush1.bf16.msra.mxu0 0
        %880 = vmatprep.subr.bf16.mxu0 0
        %881 = vmatpush1.bf16.msra.mxu0 0
        %882 = vmatprep.subr.bf16.mxu0 0
        %883 = vmatpush1.bf16.msra.mxu0 0
        %884 = vmatprep.subr.bf16.mxu0 0
        %885 = vmatpush1.bf16.msra.mxu0 0
        %886 = vmatprep.mubr.bf16.mxu0 0
        %887 = vmatmul.mubr.bf16.gmra.mrb[0].mxu0 %v676
        %v888 = vpop.f32.mrb[0].mxu0
        %v889 = vadd.f32 %v714, %v888
        %v890 = vpop.f32.mrb[0].mxu0
        %v891 = vadd.f32 %v718, %v890
        %v892 = vpop.f32.mrb[0].mxu0
        %v893 = vpop.f32.mrb[0].mxu0
        %894 = vdwg.mxu0
        %895 = vmatprep.subr.bf16.mxu0 0
        %896 = vmatpush1.bf16.msra.mxu0 %v808
        %897 = vmatprep.subr.bf16.mxu0 0
        %898 = vmatpush1.bf16.msra.mxu0 %v811
        %899 = vmatprep.subr.bf16.mxu0 0
        %900 = vmatpush1.bf16.msra.mxu0 %v814
        %901 = vmatprep.subr.bf16.mxu0 0
        %902 = vmatpush1.bf16.msra.mxu0 %v817
        %903 = vmatprep.subr.bf16.mxu0 0
        %904 = vmatpush1.bf16.msra.mxu0 %v820
        %905 = vmatprep.subr.bf16.mxu0 0
        %906 = vmatpush1.bf16.msra.mxu0 %v823
        %907 = vmatprep.subr.bf16.mxu0 0
        %908 = vmatpush1.bf16.msra.mxu0 %v826
        %909 = vmatprep.subr.bf16.mxu0 0
        %910 = vmatpush1.bf16.msra.mxu0 %v829
        %911 = vmatprep.subr.bf16.mxu0 0
        %912 = vmatpush1.bf16.msra.mxu0 0
        %913 = vmatprep.subr.bf16.mxu0 0
        %914 = vmatpush1.bf16.msra.mxu0 0
        %915 = vmatprep.subr.bf16.mxu0 0
        %916 = vmatpush1.bf16.msra.mxu0 0
        %917 = vmatprep.subr.bf16.mxu0 0
        %918 = vmatpush1.bf16.msra.mxu0 0
        %919 = vmatprep.subr.bf16.mxu0 0
        %920 = vmatpush1.bf16.msra.mxu0 0
        %921 = vmatprep.subr.bf16.mxu0 0
        %922 = vmatpush1.bf16.msra.mxu0 0
        %923 = vmatprep.subr.bf16.mxu0 0
        %924 = vmatpush1.bf16.msra.mxu0 0
        %925 = vmatprep.subr.bf16.mxu0 0
        %926 = vmatpush1.bf16.msra.mxu0 0
        %927 = vmatprep.mubr.bf16.mxu0 0
        %928 = vmatmul.mubr.bf16.gmra.mrb[0].mxu0 %v676
        %v929 = vpop.f32.mrb[0].mxu0
        %v930 = vadd.f32 %v722, %v929
        %v931 = vpop.f32.mrb[0].mxu0
        %v932 = vpop.f32.mrb[0].mxu0
        %v933 = vpop.f32.mrb[0].mxu0
        %934 = vdwg.mxu0
        %v935 = vpack.c.bf16 %v889, %v889
        %v936 = vpack.c.bf16 %v891, %v891
        %v937 = vpack.c.bf16 %v930, %v930
        %939 = vrot.lane.b32.xlu0 %v935, 96
        %v940 = vpop.permute.xlu0 %939
        %941 = vrot.lane.b32.xlu0 %v935, 64
        %v942 = vpop.permute.xlu0 %941
        %943 = vrot.lane.b32.xlu0 %v935, 32
        %v944 = vpop.permute.xlu0 %943
        %v946 = vunpack.c.l.s4 1983009808
        %v947 = vunpack.c.0.s8 %v946
        %v948 = vlaneseq
        %v949 = vshrl.u32 %v948, 7
        %v950 = vsub.s32 %v947, %v949
        %v951 = vrot.slane %v935, %v950
        %v954 = vunpack.c.l.s4 1983009808
        %v955 = vunpack.c.0.s8 %v954
        %v956 = vlaneseq
        %v957 = vshrl.u32 %v956, 7
        %v958 = vsub.s32 %v955, %v957
        %v959 = vrot.slane %v942, %v958
        %v960 = vcombine.low %v951, %v959
        %v961 = vcombine.high %v951, %v959
        %v963 = vunpack.c.l.s4 1934713408
        %v964 = vunpack.c.0.s8 %v963
        %v965 = vlaneseq
        %v966 = vshrl.u32 %v965, 7
        %v967 = vsub.s32 %v964, %v966
        %v968 = vrot.slane %v960, %v967
        %v970 = vunpack.c.l.s4 1934713408
        %v971 = vunpack.c.0.s8 %v970
        %v972 = vlaneseq
        %v973 = vshrl.u32 %v972, 7
        %v974 = vsub.s32 %v971, %v973
        %v975 = vrot.slane %v961, %v974
        %v976 = vcombine.high %v968, 0
        %v977 = vcombine.high %v975, 0
        %v980 = vunpack.c.l.s4 1983009808
        %v981 = vunpack.c.0.s8 %v980
        %v982 = vlaneseq
        %v983 = vshrl.u32 %v982, 7
        %v984 = vsub.s32 %v981, %v983
        %v985 = vrot.slane %v940, %v984
        %v988 = vunpack.c.l.s4 1983009808
        %v989 = vunpack.c.0.s8 %v988
        %v990 = vlaneseq
        %v991 = vshrl.u32 %v990, 7
        %v992 = vsub.s32 %v989, %v991
        %v993 = vrot.slane %v944, %v992
        %v994 = vcombine.low %v985, %v993
        %v995 = vcombine.high %v985, %v993
        %v997 = vunpack.c.l.s4 1934713408
        %v998 = vunpack.c.0.s8 %v997
        %v999 = vlaneseq
        %v1000 = vshrl.u32 %v999, 7
        %v1001 = vsub.s32 %v998, %v1000
        %v1002 = vrot.slane %v994, %v1001
        %v1004 = vunpack.c.l.s4 1934713408
        %v1005 = vunpack.c.0.s8 %v1004
        %v1006 = vlaneseq
        %v1007 = vshrl.u32 %v1006, 7
        %v1008 = vsub.s32 %v1005, %v1007
        %v1009 = vrot.slane %v995, %v1008
        %v1010 = vcombine.high %v1002, 0
        %v1011 = vcombine.high %v1009, 0
        %v1014 = vpack.i.b16 %v1002, %v968
        %v1016 = vshrl.u32 %v968, 16
        %v1017 = vshrl.u32 %v1002, 16
        %v1018 = vpack.i.b16 %v1017, %v1016
        %v1022 = vpack.i.b16 %v1010, %v976
        %v1024 = vshrl.u32 %v976, 16
        %v1025 = vshrl.u32 %v1010, 16
        %v1026 = vpack.i.b16 %v1025, %v1024
        %v1030 = vpack.i.b16 %v1009, %v975
        %v1032 = vshrl.u32 %v975, 16
        %v1033 = vshrl.u32 %v1009, 16
        %v1034 = vpack.i.b16 %v1033, %v1032
        %v1038 = vpack.i.b16 %v1011, %v977
        %v1040 = vshrl.u32 %v977, 16
        %v1041 = vshrl.u32 %v1011, 16
        %v1042 = vpack.i.b16 %v1041, %v1040
        %v1044 = vcombine.low %v1014, %v1030
        %v1046 = vunpack.c.l.s4 1983009808
        %v1047 = vunpack.c.0.s8 %v1046
        %v1048 = vlaneseq
        %v1049 = vshrl.u32 %v1048, 7
        %v1050 = vsub.s32 %v1047, %v1049
        %v1051 = vrot.slane %v1044, %v1050
        %v1052 = vcombine.low %v1022, %v1038
        %v1054 = vunpack.c.l.s4 1983009808
        %v1055 = vunpack.c.0.s8 %v1054
        %v1056 = vlaneseq
        %v1057 = vshrl.u32 %v1056, 7
        %v1058 = vsub.s32 %v1055, %v1057
        %v1059 = vrot.slane %v1052, %v1058
        %v1060 = vcombine.low %v1051, %v1059
        %v1062 = vunpack.c.l.s4 1934713408
        %v1063 = vunpack.c.0.s8 %v1062
        %v1064 = vlaneseq
        %v1065 = vshrl.u32 %v1064, 7
        %v1066 = vsub.s32 %v1063, %v1065
        %v1067 = vrot.slane %v1060, %v1066
        %v1068 = vcombine.high %v1067, 0
        %v1069 = vcombine.low %v1018, %v1034
        %v1071 = vunpack.c.l.s4 1983009808
        %v1072 = vunpack.c.0.s8 %v1071
        %v1073 = vlaneseq
        %v1074 = vshrl.u32 %v1073, 7
        %v1075 = vsub.s32 %v1072, %v1074
        %v1076 = vrot.slane %v1069, %v1075
        %v1077 = vcombine.low %v1026, %v1042
        %v1079 = vunpack.c.l.s4 1983009808
        %v1080 = vunpack.c.0.s8 %v1079
        %v1081 = vlaneseq
        %v1082 = vshrl.u32 %v1081, 7
        %v1083 = vsub.s32 %v1080, %v1082
        %v1084 = vrot.slane %v1077, %v1083
        %v1085 = vcombine.low %v1076, %v1084
        %v1087 = vunpack.c.l.s4 1934713408
        %v1088 = vunpack.c.0.s8 %v1087
        %v1089 = vlaneseq
        %v1090 = vshrl.u32 %v1089, 7
        %v1091 = vsub.s32 %v1088, %v1090
        %v1092 = vrot.slane %v1085, %v1091
        %v1093 = vcombine.high %v1092, 0
        %v1096 = vpack.i.b16 %v1092, %v1067
        %v1097 = vshrl.u32 %v1067, 16
        %v1098 = vshrl.u32 %v1092, 16
        %v1099 = vpack.i.b16 %v1098, %v1097
        %v1102 = vpack.i.b16 %v1093, %v1068
        %v1103 = vshrl.u32 %v1068, 16
        %v1104 = vshrl.u32 %v1093, 16
        %v1105 = vpack.i.b16 %v1104, %v1103
        %1107 = vrot.lane.b32.xlu0 %v936, 96
        %v1108 = vpop.permute.xlu0 %1107
        %1109 = vrot.lane.b32.xlu0 %v936, 64
        %v1110 = vpop.permute.xlu0 %1109
        %1111 = vrot.lane.b32.xlu0 %v936, 32
        %v1112 = vpop.permute.xlu0 %1111
        %v1114 = vunpack.c.l.s4 1983009808
        %v1115 = vunpack.c.0.s8 %v1114
        %v1116 = vlaneseq
        %v1117 = vshrl.u32 %v1116, 7
        %v1118 = vsub.s32 %v1115, %v1117
        %v1119 = vrot.slane %v936, %v1118
        %v1122 = vunpack.c.l.s4 1983009808
        %v1123 = vunpack.c.0.s8 %v1122
        %v1124 = vlaneseq
        %v1125 = vshrl.u32 %v1124, 7
        %v1126 = vsub.s32 %v1123, %v1125
        %v1127 = vrot.slane %v1110, %v1126
        %v1128 = vcombine.low %v1119, %v1127
        %v1129 = vcombine.high %v1119, %v1127
        %v1131 = vunpack.c.l.s4 1934713408
        %v1132 = vunpack.c.0.s8 %v1131
        %v1133 = vlaneseq
        %v1134 = vshrl.u32 %v1133, 7
        %v1135 = vsub.s32 %v1132, %v1134
        %v1136 = vrot.slane %v1128, %v1135
        %v1138 = vunpack.c.l.s4 1934713408
        %v1139 = vunpack.c.0.s8 %v1138
        %v1140 = vlaneseq
        %v1141 = vshrl.u32 %v1140, 7
        %v1142 = vsub.s32 %v1139, %v1141
        %v1143 = vrot.slane %v1129, %v1142
        %v1144 = vcombine.high %v1136, 0
        %v1145 = vcombine.high %v1143, 0
        %v1148 = vunpack.c.l.s4 1983009808
        %v1149 = vunpack.c.0.s8 %v1148
        %v1150 = vlaneseq
        %v1151 = vshrl.u32 %v1150, 7
        %v1152 = vsub.s32 %v1149, %v1151
        %v1153 = vrot.slane %v1108, %v1152
        %v1156 = vunpack.c.l.s4 1983009808
        %v1157 = vunpack.c.0.s8 %v1156
        %v1158 = vlaneseq
        %v1159 = vshrl.u32 %v1158, 7
        %v1160 = vsub.s32 %v1157, %v1159
        %v1161 = vrot.slane %v1112, %v1160
        %v1162 = vcombine.low %v1153, %v1161
        %v1163 = vcombine.high %v1153, %v1161
        %v1165 = vunpack.c.l.s4 1934713408
        %v1166 = vunpack.c.0.s8 %v1165
        %v1167 = vlaneseq
        %v1168 = vshrl.u32 %v1167, 7
        %v1169 = vsub.s32 %v1166, %v1168
        %v1170 = vrot.slane %v1162, %v1169
        %v1172 = vunpack.c.l.s4 1934713408
        %v1173 = vunpack.c.0.s8 %v1172
        %v1174 = vlaneseq
        %v1175 = vshrl.u32 %v1174, 7
        %v1176 = vsub.s32 %v1173, %v1175
        %v1177 = vrot.slane %v1163, %v1176
        %v1178 = vcombine.high %v1170, 0
        %v1179 = vcombine.high %v1177, 0
        %v1182 = vpack.i.b16 %v1170, %v1136
        %v1184 = vshrl.u32 %v1136, 16
        %v1185 = vshrl.u32 %v1170, 16
        %v1186 = vpack.i.b16 %v1185, %v1184
        %v1190 = vpack.i.b16 %v1178, %v1144
        %v1192 = vshrl.u32 %v1144, 16
        %v1193 = vshrl.u32 %v1178, 16
        %v1194 = vpack.i.b16 %v1193, %v1192
        %v1198 = vpack.i.b16 %v1177, %v1143
        %v1200 = vshrl.u32 %v1143, 16
        %v1201 = vshrl.u32 %v1177, 16
        %v1202 = vpack.i.b16 %v1201, %v1200
        %v1206 = vpack.i.b16 %v1179, %v1145
        %v1208 = vshrl.u32 %v1145, 16
        %v1209 = vshrl.u32 %v1179, 16
        %v1210 = vpack.i.b16 %v1209, %v1208
        %v1212 = vcombine.low %v1182, %v1198
        %v1214 = vunpack.c.l.s4 1983009808
        %v1215 = vunpack.c.0.s8 %v1214
        %v1216 = vlaneseq
        %v1217 = vshrl.u32 %v1216, 7
        %v1218 = vsub.s32 %v1215, %v1217
        %v1219 = vrot.slane %v1212, %v1218
        %v1220 = vcombine.low %v1190, %v1206
        %v1222 = vunpack.c.l.s4 1983009808
        %v1223 = vunpack.c.0.s8 %v1222
        %v1224 = vlaneseq
        %v1225 = vshrl.u32 %v1224, 7
        %v1226 = vsub.s32 %v1223, %v1225
        %v1227 = vrot.slane %v1220, %v1226
        %v1228 = vcombine.low %v1219, %v1227
        %v1230 = vunpack.c.l.s4 1934713408
        %v1231 = vunpack.c.0.s8 %v1230
        %v1232 = vlaneseq
        %v1233 = vshrl.u32 %v1232, 7
        %v1234 = vsub.s32 %v1231, %v1233
        %v1235 = vrot.slane %v1228, %v1234
        %v1236 = vcombine.high %v1235, 0
        %v1237 = vcombine.low %v1186, %v1202
        %v1239 = vunpack.c.l.s4 1983009808
        %v1240 = vunpack.c.0.s8 %v1239
        %v1241 = vlaneseq
        %v1242 = vshrl.u32 %v1241, 7
        %v1243 = vsub.s32 %v1240, %v1242
        %v1244 = vrot.slane %v1237, %v1243
        %v1245 = vcombine.low %v1194, %v1210
        %v1247 = vunpack.c.l.s4 1983009808
        %v1248 = vunpack.c.0.s8 %v1247
        %v1249 = vlaneseq
        %v1250 = vshrl.u32 %v1249, 7
        %v1251 = vsub.s32 %v1248, %v1250
        %v1252 = vrot.slane %v1245, %v1251
        %v1253 = vcombine.low %v1244, %v1252
        %v1255 = vunpack.c.l.s4 1934713408
        %v1256 = vunpack.c.0.s8 %v1255
        %v1257 = vlaneseq
        %v1258 = vshrl.u32 %v1257, 7
        %v1259 = vsub.s32 %v1256, %v1258
        %v1260 = vrot.slane %v1253, %v1259
        %v1261 = vcombine.high %v1260, 0
        %v1264 = vpack.i.b16 %v1260, %v1235
        %v1265 = vshrl.u32 %v1235, 16
        %v1266 = vshrl.u32 %v1260, 16
        %v1267 = vpack.i.b16 %v1266, %v1265
        %v1270 = vpack.i.b16 %v1261, %v1236
        %v1271 = vshrl.u32 %v1236, 16
        %v1272 = vshrl.u32 %v1261, 16
        %v1273 = vpack.i.b16 %v1272, %v1271
        %1275 = vrot.lane.b32.xlu0 %v937, 96
        %v1276 = vpop.permute.xlu0 %1275
        %1277 = vrot.lane.b32.xlu0 %v937, 64
        %v1278 = vpop.permute.xlu0 %1277
        %1279 = vrot.lane.b32.xlu0 %v937, 32
        %v1280 = vpop.permute.xlu0 %1279
        %v1282 = vunpack.c.l.s4 1983009808
        %v1283 = vunpack.c.0.s8 %v1282
        %v1284 = vlaneseq
        %v1285 = vshrl.u32 %v1284, 7
        %v1286 = vsub.s32 %v1283, %v1285
        %v1287 = vrot.slane %v937, %v1286
        %v1290 = vunpack.c.l.s4 1983009808
        %v1291 = vunpack.c.0.s8 %v1290
        %v1292 = vlaneseq
        %v1293 = vshrl.u32 %v1292, 7
        %v1294 = vsub.s32 %v1291, %v1293
        %v1295 = vrot.slane %v1278, %v1294
        %v1296 = vcombine.low %v1287, %v1295
        %v1297 = vcombine.high %v1287, %v1295
        %v1299 = vunpack.c.l.s4 1934713408
        %v1300 = vunpack.c.0.s8 %v1299
        %v1301 = vlaneseq
        %v1302 = vshrl.u32 %v1301, 7
        %v1303 = vsub.s32 %v1300, %v1302
        %v1304 = vrot.slane %v1296, %v1303
        %v1306 = vunpack.c.l.s4 1934713408
        %v1307 = vunpack.c.0.s8 %v1306
        %v1308 = vlaneseq
        %v1309 = vshrl.u32 %v1308, 7
        %v1310 = vsub.s32 %v1307, %v1309
        %v1311 = vrot.slane %v1297, %v1310
        %v1312 = vcombine.high %v1304, 0
        %v1313 = vcombine.high %v1311, 0
        %v1316 = vunpack.c.l.s4 1983009808
        %v1317 = vunpack.c.0.s8 %v1316
        %v1318 = vlaneseq
        %v1319 = vshrl.u32 %v1318, 7
        %v1320 = vsub.s32 %v1317, %v1319
        %v1321 = vrot.slane %v1276, %v1320
        %v1324 = vunpack.c.l.s4 1983009808
        %v1325 = vunpack.c.0.s8 %v1324
        %v1326 = vlaneseq
        %v1327 = vshrl.u32 %v1326, 7
        %v1328 = vsub.s32 %v1325, %v1327
        %v1329 = vrot.slane %v1280, %v1328
        %v1330 = vcombine.low %v1321, %v1329
        %v1331 = vcombine.high %v1321, %v1329
        %v1333 = vunpack.c.l.s4 1934713408
        %v1334 = vunpack.c.0.s8 %v1333
        %v1335 = vlaneseq
        %v1336 = vshrl.u32 %v1335, 7
        %v1337 = vsub.s32 %v1334, %v1336
        %v1338 = vrot.slane %v1330, %v1337
        %v1340 = vunpack.c.l.s4 1934713408
        %v1341 = vunpack.c.0.s8 %v1340
        %v1342 = vlaneseq
        %v1343 = vshrl.u32 %v1342, 7
        %v1344 = vsub.s32 %v1341, %v1343
        %v1345 = vrot.slane %v1331, %v1344
        %v1346 = vcombine.high %v1338, 0
        %v1347 = vcombine.high %v1345, 0
        %v1350 = vpack.i.b16 %v1338, %v1304
        %v1352 = vshrl.u32 %v1304, 16
        %v1353 = vshrl.u32 %v1338, 16
        %v1354 = vpack.i.b16 %v1353, %v1352
        %v1358 = vpack.i.b16 %v1346, %v1312
        %v1360 = vshrl.u32 %v1312, 16
        %v1361 = vshrl.u32 %v1346, 16
        %v1362 = vpack.i.b16 %v1361, %v1360
        %v1366 = vpack.i.b16 %v1345, %v1311
        %v1368 = vshrl.u32 %v1311, 16
        %v1369 = vshrl.u32 %v1345, 16
        %v1370 = vpack.i.b16 %v1369, %v1368
        %v1374 = vpack.i.b16 %v1347, %v1313
        %v1376 = vshrl.u32 %v1313, 16
        %v1377 = vshrl.u32 %v1347, 16
        %v1378 = vpack.i.b16 %v1377, %v1376
        %v1380 = vcombine.low %v1350, %v1366
        %v1382 = vunpack.c.l.s4 1983009808
        %v1383 = vunpack.c.0.s8 %v1382
        %v1384 = vlaneseq
        %v1385 = vshrl.u32 %v1384, 7
        %v1386 = vsub.s32 %v1383, %v1385
        %v1387 = vrot.slane %v1380, %v1386
        %v1388 = vcombine.low %v1358, %v1374
        %v1390 = vunpack.c.l.s4 1983009808
        %v1391 = vunpack.c.0.s8 %v1390
        %v1392 = vlaneseq
        %v1393 = vshrl.u32 %v1392, 7
        %v1394 = vsub.s32 %v1391, %v1393
        %v1395 = vrot.slane %v1388, %v1394
        %v1396 = vcombine.low %v1387, %v1395
        %v1398 = vunpack.c.l.s4 1934713408
        %v1399 = vunpack.c.0.s8 %v1398
        %v1400 = vlaneseq
        %v1401 = vshrl.u32 %v1400, 7
        %v1402 = vsub.s32 %v1399, %v1401
        %v1403 = vrot.slane %v1396, %v1402
        %v1404 = vcombine.high %v1403, 0
        %v1405 = vcombine.low %v1354, %v1370
        %v1407 = vunpack.c.l.s4 1983009808
        %v1408 = vunpack.c.0.s8 %v1407
        %v1409 = vlaneseq
        %v1410 = vshrl.u32 %v1409, 7
        %v1411 = vsub.s32 %v1408, %v1410
        %v1412 = vrot.slane %v1405, %v1411
        %v1413 = vcombine.low %v1362, %v1378
        %v1415 = vunpack.c.l.s4 1983009808
        %v1416 = vunpack.c.0.s8 %v1415
        %v1417 = vlaneseq
        %v1418 = vshrl.u32 %v1417, 7
        %v1419 = vsub.s32 %v1416, %v1418
        %v1420 = vrot.slane %v1413, %v1419
        %v1421 = vcombine.low %v1412, %v1420
        %v1423 = vunpack.c.l.s4 1934713408
        %v1424 = vunpack.c.0.s8 %v1423
        %v1425 = vlaneseq
        %v1426 = vshrl.u32 %v1425, 7
        %v1427 = vsub.s32 %v1424, %v1426
        %v1428 = vrot.slane %v1421, %v1427
        %v1429 = vcombine.high %v1428, 0
        %v1432 = vpack.i.b16 %v1428, %v1403
        %v1433 = vshrl.u32 %v1403, 16
        %v1434 = vshrl.u32 %v1428, 16
        %v1435 = vpack.i.b16 %v1434, %v1433
        %v1438 = vpack.i.b16 %v1429, %v1404
        %v1439 = vshrl.u32 %v1404, 16
        %v1440 = vshrl.u32 %v1429, 16
        %v1441 = vpack.i.b16 %v1440, %v1439
        %v1443 = vsel %vm632, %v1096, 0
        %v1446 = vsel %vm632, %v1264, 0
        %1448 = vmatprep.subr.bf16.mxu0 0
        %1449 = vmatpush1.bf16.xpose.msra.mxu0 %v1446
        %1450 = vmatprep.subr.bf16.mxu0 0
        %1451 = vmatpush1.bf16.xpose.msra.mxu0 0
        %1452 = vmatprep.subr.bf16.mxu0 0
        %1453 = vmatpush1.bf16.xpose.msra.mxu0 0
        %1454 = vmatprep.subr.bf16.mxu0 0
        %1455 = vmatpush1.bf16.xpose.msra.mxu0 0
        %1456 = vmatprep.subr.bf16.mxu0 0
        %1457 = vmatpush1.bf16.xpose.msra.mxu0 0
        %1458 = vmatprep.subr.bf16.mxu0 0
        %1459 = vmatpush1.bf16.xpose.msra.mxu0 0
        %1460 = vmatprep.subr.bf16.mxu0 0
        %1461 = vmatpush1.bf16.xpose.msra.mxu0 0
        %1462 = vmatprep.subr.bf16.mxu0 0
        %1463 = vmatpush1.bf16.xpose.msra.mxu0 0
        %1464 = vmatprep.subr.bf16.mxu0 0
        %1465 = vmatpush1.bf16.xpose.msra.mxu0 0
        %1466 = vmatprep.subr.bf16.mxu0 0
        %1467 = vmatpush1.bf16.xpose.msra.mxu0 0
        %1468 = vmatprep.subr.bf16.mxu0 0
        %1469 = vmatpush1.bf16.xpose.msra.mxu0 0
        %1470 = vmatprep.subr.bf16.mxu0 0
        %1471 = vmatpush1.bf16.xpose.msra.mxu0 0
        %1472 = vmatprep.subr.bf16.mxu0 0
        %1473 = vmatpush1.bf16.xpose.msra.mxu0 0
        %1474 = vmatprep.subr.bf16.mxu0 0
        %1475 = vmatpush1.bf16.xpose.msra.mxu0 0
        %1476 = vmatprep.subr.bf16.mxu0 0
        %1477 = vmatpush1.bf16.xpose.msra.mxu0 0
        %1478 = vmatprep.subr.bf16.mxu0 0
        %1479 = vmatpush1.bf16.xpose.msra.mxu0 0
        %1480 = vmatprep.mubr.bf16.mxu0 0
        %1481 = vmatmul.mubr.bf16.gmra.mrb[0].mxu0 %v1443
        %v1482 = vpop.f32.mrb[0].mxu0
        %v1483 = vadd.f32 0.0, %v1482
        %v1484 = vpop.f32.mrb[0].mxu0
        %v1485 = vpop.f32.mrb[0].mxu0
        %v1486 = vpop.f32.mrb[0].mxu0
        %1487 = vdwg.mxu0
        %v1489 = vsel %vm632, %v1099, 0
        %v1492 = vsel %vm632, %v1267, 0
        %1494 = vmatprep.subr.bf16.mxu0 0
        %1495 = vmatpush1.bf16.xpose.msra.mxu0 %v1492
        %1496 = vmatprep.subr.bf16.mxu0 0
        %1497 = vmatpush1.bf16.xpose.msra.mxu0 0
        %1498 = vmatprep.subr.bf16.mxu0 0
        %1499 = vmatpush1.bf16.xpose.msra.mxu0 0
        %1500 = vmatprep.subr.bf16.mxu0 0
        %1501 = vmatpush1.bf16.xpose.msra.mxu0 0
        %1502 = vmatprep.subr.bf16.mxu0 0
        %1503 = vmatpush1.bf16.xpose.msra.mxu0 0
        %1504 = vmatprep.subr.bf16.mxu0 0
        %1505 = vmatpush1.bf16.xpose.msra.mxu0 0
        %1506 = vmatprep.subr.bf16.mxu0 0
        %1507 = vmatpush1.bf16.xpose.msra.mxu0 0
        %1508 = vmatprep.subr.bf16.mxu0 0
        %1509 = vmatpush1.bf16.xpose.msra.mxu0 0
        %1510 = vmatprep.subr.bf16.mxu0 0
        %1511 = vmatpush1.bf16.xpose.msra.mxu0 0
        %1512 = vmatprep.subr.bf16.mxu0 0
        %1513 = vmatpush1.bf16.xpose.msra.mxu0 0
        %1514 = vmatprep.subr.bf16.mxu0 0
        %1515 = vmatpush1.bf16.xpose.msra.mxu0 0
        %1516 = vmatprep.subr.bf16.mxu0 0
        %1517 = vmatpush1.bf16.xpose.msra.mxu0 0
        %1518 = vmatprep.subr.bf16.mxu0 0
        %1519 = vmatpush1.bf16.xpose.msra.mxu0 0
        %1520 = vmatprep.subr.bf16.mxu0 0
        %1521 = vmatpush1.bf16.xpose.msra.mxu0 0
        %1522 = vmatprep.subr.bf16.mxu0 0
        %1523 = vmatpush1.bf16.xpose.msra.mxu0 0
        %1524 = vmatprep.subr.bf16.mxu0 0
        %1525 = vmatpush1.bf16.xpose.msra.mxu0 0
        %1526 = vmatprep.mubr.bf16.mxu0 0
        %1527 = vmatmul.mubr.bf16.gmra.mrb[0].mxu0 %v1489
        %v1528 = vpop.f32.mrb[0].mxu0
        %v1529 = vadd.f32 0.0, %v1528
        %v1530 = vpop.f32.mrb[0].mxu0
        %v1531 = vpop.f32.mrb[0].mxu0
        %v1532 = vpop.f32.mrb[0].mxu0
        %1533 = vdwg.mxu0
        %v1535 = vsel %vm632, %v1102, 0
        %v1538 = vsel %vm632, %v1270, 0
        %1540 = vmatprep.subr.bf16.mxu0 0
        %1541 = vmatpush1.bf16.xpose.msra.mxu0 %v1538
        %1542 = vmatprep.subr.bf16.mxu0 0
        %1543 = vmatpush1.bf16.xpose.msra.mxu0 0
        %1544 = vmatprep.subr.bf16.mxu0 0
        %1545 = vmatpush1.bf16.xpose.msra.mxu0 0
        %1546 = vmatprep.subr.bf16.mxu0 0
        %1547 = vmatpush1.bf16.xpose.msra.mxu0 0
        %1548 = vmatprep.subr.bf16.mxu0 0
        %1549 = vmatpush1.bf16.xpose.msra.mxu0 0
        %1550 = vmatprep.subr.bf16.mxu0 0
        %1551 = vmatpush1.bf16.xpose.msra.mxu0 0
        %1552 = vmatprep.subr.bf16.mxu0 0
        %1553 = vmatpush1.bf16.xpose.msra.mxu0 0
        %1554 = vmatprep.subr.bf16.mxu0 0
        %1555 = vmatpush1.bf16.xpose.msra.mxu0 0
        %1556 = vmatprep.subr.bf16.mxu0 0
        %1557 = vmatpush1.bf16.xpose.msra.mxu0 0
        %1558 = vmatprep.subr.bf16.mxu0 0
        %1559 = vmatpush1.bf16.xpose.msra.mxu0 0
        %1560 = vmatprep.subr.bf16.mxu0 0
        %1561 = vmatpush1.bf16.xpose.msra.mxu0 0
        %1562 = vmatprep.subr.bf16.mxu0 0
        %1563 = vmatpush1.bf16.xpose.msra.mxu0 0
        %1564 = vmatprep.subr.bf16.mxu0 0
        %1565 = vmatpush1.bf16.xpose.msra.mxu0 0
        %1566 = vmatprep.subr.bf16.mxu0 0
        %1567 = vmatpush1.bf16.xpose.msra.mxu0 0
        %1568 = vmatprep.subr.bf16.mxu0 0
        %1569 = vmatpush1.bf16.xpose.msra.mxu0 0
        %1570 = vmatprep.subr.bf16.mxu0 0
        %1571 = vmatpush1.bf16.xpose.msra.mxu0 0
        %1572 = vmatprep.mubr.bf16.mxu0 0
        %1573 = vmatmul.mubr.bf16.gmra.mrb[0].mxu0 %v1535
        %v1574 = vpop.f32.mrb[0].mxu0
        %v1575 = vadd.f32 0.0, %v1574
        %v1576 = vpop.f32.mrb[0].mxu0
        %v1577 = vpop.f32.mrb[0].mxu0
        %v1578 = vpop.f32.mrb[0].mxu0
        %1579 = vdwg.mxu0
        %v1581 = vsel %vm632, %v1105, 0
        %v1584 = vsel %vm632, %v1273, 0
        %1586 = vmatprep.subr.bf16.mxu0 0
        %1587 = vmatpush1.bf16.xpose.msra.mxu0 %v1584
        %1588 = vmatprep.subr.bf16.mxu0 0
        %1589 = vmatpush1.bf16.xpose.msra.mxu0 0
        %1590 = vmatprep.subr.bf16.mxu0 0
        %1591 = vmatpush1.bf16.xpose.msra.mxu0 0
        %1592 = vmatprep.subr.bf16.mxu0 0
        %1593 = vmatpush1.bf16.xpose.msra.mxu0 0
        %1594 = vmatprep.subr.bf16.mxu0 0
        %1595 = vmatpush1.bf16.xpose.msra.mxu0 0
        %1596 = vmatprep.subr.bf16.mxu0 0
        %1597 = vmatpush1.bf16.xpose.msra.mxu0 0
        %1598 = vmatprep.subr.bf16.mxu0 0
        %1599 = vmatpush1.bf16.xpose.msra.mxu0 0
        %1600 = vmatprep.subr.bf16.mxu0 0
        %1601 = vmatpush1.bf16.xpose.msra.mxu0 0
        %1602 = vmatprep.subr.bf16.mxu0 0
        %1603 = vmatpush1.bf16.xpose.msra.mxu0 0
        %1604 = vmatprep.subr.bf16.mxu0 0
        %1605 = vmatpush1.bf16.xpose.msra.mxu0 0
        %1606 = vmatprep.subr.bf16.mxu0 0
        %1607 = vmatpush1.bf16.xpose.msra.mxu0 0
        %1608 = vmatprep.subr.bf16.mxu0 0
        %1609 = vmatpush1.bf16.xpose.msra.mxu0 0
        %1610 = vmatprep.subr.bf16.mxu0 0
        %1611 = vmatpush1.bf16.xpose.msra.mxu0 0
        %1612 = vmatprep.subr.bf16.mxu0 0
        %1613 = vmatpush1.bf16.xpose.msra.mxu0 0
        %1614 = vmatprep.subr.bf16.mxu0 0
        %1615 = vmatpush1.bf16.xpose.msra.mxu0 0
        %1616 = vmatprep.subr.bf16.mxu0 0
        %1617 = vmatpush1.bf16.xpose.msra.mxu0 0
        %1618 = vmatprep.mubr.bf16.mxu0 0
        %1619 = vmatmul.mubr.bf16.gmra.mrb[0].mxu0 %v1581
        %v1620 = vpop.f32.mrb[0].mxu0
        %v1621 = vadd.f32 0.0, %v1620
        %v1622 = vpop.f32.mrb[0].mxu0
        %v1623 = vpop.f32.mrb[0].mxu0
        %v1624 = vpop.f32.mrb[0].mxu0
        %1625 = vdwg.mxu0
        %vm1626 = vcmask 64512
        %v1627 = vsel %vm1626, %v1483, -inf
        %1628 = vmax.xlane.f32.xlu0 %v1627
        %v1629 = vpop.xlane.xlu0 %1628
        %v1630 = vsel %vm1626, %v1529, -inf
        %1631 = vmax.xlane.f32.xlu0 %v1630
        %v1632 = vpop.xlane.xlu0 %1631
        %v1633 = vsel %vm1626, %v1575, -inf
        %1634 = vmax.xlane.f32.xlu0 %v1633
        %v1635 = vpop.xlane.xlu0 %1634
        %v1636 = vsel %vm1626, %v1621, -inf
        %1637 = vmax.xlane.f32.xlu0 %v1636
        %v1638 = vpop.xlane.xlu0 %1637
        %v1639 = vsub.f32 %v1483, %v1629
        %v1640 = vsub.f32 %v1529, %v1632
        %v1641 = vsub.f32 %v1575, %v1635
        %v1642 = vsub.f32 %v1621, %v1638
        %v1643 = vmul.f32 %v1639, 1.442695
        %v1644 = vpow.pop %v1643
        %v1645 = vmul.f32 %v1640, 1.442695
        %v1646 = vpow.pop %v1645
        %v1647 = vmul.f32 %v1641, 1.442695
        %v1648 = vpow.pop %v1647
        %v1649 = vmul.f32 %v1642, 1.442695
        %v1650 = vpow.pop %v1649
        %v1651 = vsel %vm1626, %v1644, 0.0
        %1652 = vadd.xlane.f32.xlu0 %v1651
        %v1653 = vpop.xlane.xlu0 %1652
        %v1654 = vsel %vm1626, %v1646, 0.0
        %1655 = vadd.xlane.f32.xlu0 %v1654
        %v1656 = vpop.xlane.xlu0 %1655
        %v1657 = vsel %vm1626, %v1648, 0.0
        %1658 = vadd.xlane.f32.xlu0 %v1657
        %v1659 = vpop.xlane.xlu0 %1658
        %v1660 = vsel %vm1626, %v1650, 0.0
        %1661 = vadd.xlane.f32.xlu0 %v1660
        %v1662 = vpop.xlane.xlu0 %1661
        %v1663 = vrcp.pop %v1653
        %v1664 = vrcp.pop %v1656
        %v1665 = vrcp.pop %v1659
        %v1666 = vrcp.pop %v1662
        %v1667 = vmul.f32 %v1644, %v1663
        %v1668 = vmul.f32 %v1646, %v1664
        %v1669 = vmul.f32 %v1648, %v1665
        %v1670 = vmul.f32 %v1650, %v1666
        %v1671 = vpack.c.bf16 %v1667, %v1667
        %v1672 = vpack.c.bf16 %v1668, %v1668
        %v1673 = vpack.c.bf16 %v1669, %v1669
        %v1674 = vpack.c.bf16 %v1670, %v1670
        %v1676 = vsel %vm1626, %v1671, 0
        %vm1678 = vcmask 1043456
        %v1680 = vsel %vm1678, %v1432, 0
        %1682 = vmatprep.subr.bf16.mxu0 0
        %1683 = vmatpush1.bf16.msra.mxu0 %v1680
        %1684 = vmatprep.subr.bf16.mxu0 0
        %1685 = vmatpush1.bf16.msra.mxu0 0
        %1686 = vmatprep.subr.bf16.mxu0 0
        %1687 = vmatpush1.bf16.msra.mxu0 0
        %1688 = vmatprep.subr.bf16.mxu0 0
        %1689 = vmatpush1.bf16.msra.mxu0 0
        %1690 = vmatprep.subr.bf16.mxu0 0
        %1691 = vmatpush1.bf16.msra.mxu0 0
        %1692 = vmatprep.subr.bf16.mxu0 0
        %1693 = vmatpush1.bf16.msra.mxu0 0
        %1694 = vmatprep.subr.bf16.mxu0 0
        %1695 = vmatpush1.bf16.msra.mxu0 0
        %1696 = vmatprep.subr.bf16.mxu0 0
        %1697 = vmatpush1.bf16.msra.mxu0 0
        %1698 = vmatprep.subr.bf16.mxu0 0
        %1699 = vmatpush1.bf16.msra.mxu0 0
        %1700 = vmatprep.subr.bf16.mxu0 0
        %1701 = vmatpush1.bf16.msra.mxu0 0
        %1702 = vmatprep.subr.bf16.mxu0 0
        %1703 = vmatpush1.bf16.msra.mxu0 0
        %1704 = vmatprep.subr.bf16.mxu0 0
        %1705 = vmatpush1.bf16.msra.mxu0 0
        %1706 = vmatprep.subr.bf16.mxu0 0
        %1707 = vmatpush1.bf16.msra.mxu0 0
        %1708 = vmatprep.subr.bf16.mxu0 0
        %1709 = vmatpush1.bf16.msra.mxu0 0
        %1710 = vmatprep.subr.bf16.mxu0 0
        %1711 = vmatpush1.bf16.msra.mxu0 0
        %1712 = vmatprep.subr.bf16.mxu0 0
        %1713 = vmatpush1.bf16.msra.mxu0 0
        %1714 = vmatprep.mubr.bf16.mxu0 0
        %1715 = vmatmul.mubr.bf16.gmra.mrb[0].mxu0 %v1676
        %v1716 = vpop.f32.mrb[0].mxu0
        %v1717 = vadd.f32 0.0, %v1716
        %v1718 = vpop.f32.mrb[0].mxu0
        %v1719 = vpop.f32.mrb[0].mxu0
        %v1720 = vpop.f32.mrb[0].mxu0
        %1721 = vdwg.mxu0
        %v1723 = vsel %vm1626, %v1672, 0
        %v1726 = vsel %vm1678, %v1435, 0
        %1728 = vmatprep.subr.bf16.mxu0 0
        %1729 = vmatpush1.bf16.msra.mxu0 %v1726
        %1730 = vmatprep.subr.bf16.mxu0 0
        %1731 = vmatpush1.bf16.msra.mxu0 0
        %1732 = vmatprep.subr.bf16.mxu0 0
        %1733 = vmatpush1.bf16.msra.mxu0 0
        %1734 = vmatprep.subr.bf16.mxu0 0
        %1735 = vmatpush1.bf16.msra.mxu0 0
        %1736 = vmatprep.subr.bf16.mxu0 0
        %1737 = vmatpush1.bf16.msra.mxu0 0
        %1738 = vmatprep.subr.bf16.mxu0 0
        %1739 = vmatpush1.bf16.msra.mxu0 0
        %1740 = vmatprep.subr.bf16.mxu0 0
        %1741 = vmatpush1.bf16.msra.mxu0 0
        %1742 = vmatprep.subr.bf16.mxu0 0
        %1743 = vmatpush1.bf16.msra.mxu0 0
        %1744 = vmatprep.subr.bf16.mxu0 0
        %1745 = vmatpush1.bf16.msra.mxu0 0
        %1746 = vmatprep.subr.bf16.mxu0 0
        %1747 = vmatpush1.bf16.msra.mxu0 0
        %1748 = vmatprep.subr.bf16.mxu0 0
        %1749 = vmatpush1.bf16.msra.mxu0 0
        %1750 = vmatprep.subr.bf16.mxu0 0
        %1751 = vmatpush1.bf16.msra.mxu0 0
        %1752 = vmatprep.subr.bf16.mxu0 0
        %1753 = vmatpush1.bf16.msra.mxu0 0
        %1754 = vmatprep.subr.bf16.mxu0 0
        %1755 = vmatpush1.bf16.msra.mxu0 0
        %1756 = vmatprep.subr.bf16.mxu0 0
        %1757 = vmatpush1.bf16.msra.mxu0 0
        %1758 = vmatprep.subr.bf16.mxu0 0
        %1759 = vmatpush1.bf16.msra.mxu0 0
        %1760 = vmatprep.mubr.bf16.mxu0 0
        %1761 = vmatmul.mubr.bf16.gmra.mrb[0].mxu0 %v1723
        %v1762 = vpop.f32.mrb[0].mxu0
        %v1763 = vadd.f32 0.0, %v1762
        %v1764 = vpop.f32.mrb[0].mxu0
        %v1765 = vpop.f32.mrb[0].mxu0
        %v1766 = vpop.f32.mrb[0].mxu0
        %1767 = vdwg.mxu0
        %v1769 = vsel %vm1626, %v1673, 0
        %v1772 = vsel %vm1678, %v1438, 0
        %1774 = vmatprep.subr.bf16.mxu0 0
        %1775 = vmatpush1.bf16.msra.mxu0 %v1772
        %1776 = vmatprep.subr.bf16.mxu0 0
        %1777 = vmatpush1.bf16.msra.mxu0 0
        %1778 = vmatprep.subr.bf16.mxu0 0
        %1779 = vmatpush1.bf16.msra.mxu0 0
        %1780 = vmatprep.subr.bf16.mxu0 0
        %1781 = vmatpush1.bf16.msra.mxu0 0
        %1782 = vmatprep.subr.bf16.mxu0 0
        %1783 = vmatpush1.bf16.msra.mxu0 0
        %1784 = vmatprep.subr.bf16.mxu0 0
        %1785 = vmatpush1.bf16.msra.mxu0 0
        %1786 = vmatprep.subr.bf16.mxu0 0
        %1787 = vmatpush1.bf16.msra.mxu0 0
        %1788 = vmatprep.subr.bf16.mxu0 0
        %1789 = vmatpush1.bf16.msra.mxu0 0
        %1790 = vmatprep.subr.bf16.mxu0 0
        %1791 = vmatpush1.bf16.msra.mxu0 0
        %1792 = vmatprep.subr.bf16.mxu0 0
        %1793 = vmatpush1.bf16.msra.mxu0 0
        %1794 = vmatprep.subr.bf16.mxu0 0
        %1795 = vmatpush1.bf16.msra.mxu0 0
        %1796 = vmatprep.subr.bf16.mxu0 0
        %1797 = vmatpush1.bf16.msra.mxu0 0
        %1798 = vmatprep.subr.bf16.mxu0 0
        %1799 = vmatpush1.bf16.msra.mxu0 0
        %1800 = vmatprep.subr.bf16.mxu0 0
        %1801 = vmatpush1.bf16.msra.mxu0 0
        %1802 = vmatprep.subr.bf16.mxu0 0
        %1803 = vmatpush1.bf16.msra.mxu0 0
        %1804 = vmatprep.subr.bf16.mxu0 0
        %1805 = vmatpush1.bf16.msra.mxu0 0
        %1806 = vmatprep.mubr.bf16.mxu0 0
        %1807 = vmatmul.mubr.bf16.gmra.mrb[0].mxu0 %v1769
        %v1808 = vpop.f32.mrb[0].mxu0
        %v1809 = vadd.f32 0.0, %v1808
        %v1810 = vpop.f32.mrb[0].mxu0
        %v1811 = vpop.f32.mrb[0].mxu0
        %v1812 = vpop.f32.mrb[0].mxu0
        %1813 = vdwg.mxu0
        %v1815 = vsel %vm1626, %v1674, 0
        %v1818 = vsel %vm1678, %v1441, 0
        %1820 = vmatprep.subr.bf16.mxu0 0
        %1821 = vmatpush1.bf16.msra.mxu0 %v1818
        %1822 = vmatprep.subr.bf16.mxu0 0
        %1823 = vmatpush1.bf16.msra.mxu0 0
        %1824 = vmatprep.subr.bf16.mxu0 0
        %1825 = vmatpush1.bf16.msra.mxu0 0
        %1826 = vmatprep.subr.bf16.mxu0 0
        %1827 = vmatpush1.bf16.msra.mxu0 0
        %1828 = vmatprep.subr.bf16.mxu0 0
        %1829 = vmatpush1.bf16.msra.mxu0 0
        %1830 = vmatprep.subr.bf16.mxu0 0
        %1831 = vmatpush1.bf16.msra.mxu0 0
        %1832 = vmatprep.subr.bf16.mxu0 0
        %1833 = vmatpush1.bf16.msra.mxu0 0
        %1834 = vmatprep.subr.bf16.mxu0 0
        %1835 = vmatpush1.bf16.msra.mxu0 0
        %1836 = vmatprep.subr.bf16.mxu0 0
        %1837 = vmatpush1.bf16.msra.mxu0 0
        %1838 = vmatprep.subr.bf16.mxu0 0
        %1839 = vmatpush1.bf16.msra.mxu0 0
        %1840 = vmatprep.subr.bf16.mxu0 0
        %1841 = vmatpush1.bf16.msra.mxu0 0
        %1842 = vmatprep.subr.bf16.mxu0 0
        %1843 = vmatpush1.bf16.msra.mxu0 0
        %1844 = vmatprep.subr.bf16.mxu0 0
        %1845 = vmatpush1.bf16.msra.mxu0 0
        %1846 = vmatprep.subr.bf16.mxu0 0
        %1847 = vmatpush1.bf16.msra.mxu0 0
        %1848 = vmatprep.subr.bf16.mxu0 0
        %1849 = vmatpush1.bf16.msra.mxu0 0
        %1850 = vmatprep.subr.bf16.mxu0 0
        %1851 = vmatpush1.bf16.msra.mxu0 0
        %1852 = vmatprep.mubr.bf16.mxu0 0
        %1853 = vmatmul.mubr.bf16.gmra.mrb[0].mxu0 %v1815
        %v1854 = vpop.f32.mrb[0].mxu0
        %v1855 = vadd.f32 0.0, %v1854
        %v1856 = vpop.f32.mrb[0].mxu0
        %v1857 = vpop.f32.mrb[0].mxu0
        %v1858 = vpop.f32.mrb[0].mxu0
        %1859 = vdwg.mxu0
        %v1860 = vcombine.low %v1717, %v1809
        %v1861 = vcombine.high %v1717, %v1809
        %v1863 = vunpack.c.l.s4 1983009808
        %v1864 = vunpack.c.0.s8 %v1863
        %v1865 = vlaneseq
        %v1866 = vshrl.u32 %v1865, 7
        %v1867 = vsub.s32 %v1864, %v1866
        %v1868 = vrot.slane %v1860, %v1867
        %v1870 = vunpack.c.l.s4 1983009808
        %v1871 = vunpack.c.0.s8 %v1870
        %v1872 = vlaneseq
        %v1873 = vshrl.u32 %v1872, 7
        %v1874 = vsub.s32 %v1871, %v1873
        %v1875 = vrot.slane %v1861, %v1874
        %v1876 = vcombine.low %v1763, %v1855
        %v1877 = vcombine.high %v1763, %v1855
        %v1879 = vunpack.c.l.s4 1983009808
        %v1880 = vunpack.c.0.s8 %v1879
        %v1881 = vlaneseq
        %v1882 = vshrl.u32 %v1881, 7
        %v1883 = vsub.s32 %v1880, %v1882
        %v1884 = vrot.slane %v1876, %v1883
        %v1886 = vunpack.c.l.s4 1983009808
        %v1887 = vunpack.c.0.s8 %v1886
        %v1888 = vlaneseq
        %v1889 = vshrl.u32 %v1888, 7
        %v1890 = vsub.s32 %v1887, %v1889
        %v1891 = vrot.slane %v1877, %v1890
        %v1892 = vcombine.low %v1868, %v1884
        %v1893 = vcombine.high %v1868, %v1884
        %v1895 = vunpack.c.l.s4 1934713408
        %v1896 = vunpack.c.0.s8 %v1895
        %v1897 = vlaneseq
        %v1898 = vshrl.u32 %v1897, 7
        %v1899 = vsub.s32 %v1896, %v1898
        %v1900 = vrot.slane %v1892, %v1899
        %v1902 = vunpack.c.l.s4 1934713408
        %v1903 = vunpack.c.0.s8 %v1902
        %v1904 = vlaneseq
        %v1905 = vshrl.u32 %v1904, 7
        %v1906 = vsub.s32 %v1903, %v1905
        %v1907 = vrot.slane %v1893, %v1906
        %v1908 = vcombine.low %v1875, %v1891
        %v1909 = vcombine.high %v1875, %v1891
        %v1911 = vunpack.c.l.s4 1934713408
        %v1912 = vunpack.c.0.s8 %v1911
        %v1913 = vlaneseq
        %v1914 = vshrl.u32 %v1913, 7
        %v1915 = vsub.s32 %v1912, %v1914
        %v1916 = vrot.slane %v1908, %v1915
        %v1918 = vunpack.c.l.s4 1934713408
        %v1919 = vunpack.c.0.s8 %v1918
        %v1920 = vlaneseq
        %v1921 = vshrl.u32 %v1920, 7
        %v1922 = vsub.s32 %v1919, %v1921
        %v1923 = vrot.slane %v1909, %v1922
        %v1924 = vcombine.high %v1900, 0.0
        %v1925 = vcombine.high %v1907, 0.0
        %v1926 = vcombine.high %v1916, 0.0
        %v1927 = vcombine.high %v1923, 0.0
        %v1928 = vcombine.low %v1900, %v1907
        %v1930 = vunpack.c.l.s4 1983009808
        %v1931 = vunpack.c.0.s8 %v1930
        %v1932 = vlaneseq
        %v1933 = vshrl.u32 %v1932, 7
        %v1934 = vsub.s32 %v1931, %v1933
        %v1935 = vrot.slane %v1928, %v1934
        %v1936 = vcombine.low %v1924, %v1925
        %v1938 = vunpack.c.l.s4 1983009808
        %v1939 = vunpack.c.0.s8 %v1938
        %v1940 = vlaneseq
        %v1941 = vshrl.u32 %v1940, 7
        %v1942 = vsub.s32 %v1939, %v1941
        %v1943 = vrot.slane %v1936, %v1942
        %v1944 = vcombine.low %v1916, %v1923
        %v1946 = vunpack.c.l.s4 1983009808
        %v1947 = vunpack.c.0.s8 %v1946
        %v1948 = vlaneseq
        %v1949 = vshrl.u32 %v1948, 7
        %v1950 = vsub.s32 %v1947, %v1949
        %v1951 = vrot.slane %v1944, %v1950
        %v1952 = vcombine.low %v1926, %v1927
        %v1954 = vunpack.c.l.s4 1983009808
        %v1955 = vunpack.c.0.s8 %v1954
        %v1956 = vlaneseq
        %v1957 = vshrl.u32 %v1956, 7
        %v1958 = vsub.s32 %v1955, %v1957
        %v1959 = vrot.slane %v1952, %v1958
        %v1960 = vcombine.low %v1935, %v1943
        %v1961 = vcombine.high %v1935, %v1943
        %v1963 = vunpack.c.l.s4 1934713408
        %v1964 = vunpack.c.0.s8 %v1963
        %v1965 = vlaneseq
        %v1966 = vshrl.u32 %v1965, 7
        %v1967 = vsub.s32 %v1964, %v1966
        %v1968 = vrot.slane %v1960, %v1967
        %v1970 = vunpack.c.l.s4 1934713408
        %v1971 = vunpack.c.0.s8 %v1970
        %v1972 = vlaneseq
        %v1973 = vshrl.u32 %v1972, 7
        %v1974 = vsub.s32 %v1971, %v1973
        %v1975 = vrot.slane %v1961, %v1974
        %v1976 = vcombine.low %v1951, %v1959
        %v1977 = vcombine.high %v1951, %v1959
        %v1979 = vunpack.c.l.s4 1934713408
        %v1980 = vunpack.c.0.s8 %v1979
        %v1981 = vlaneseq
        %v1982 = vshrl.u32 %v1981, 7
        %v1983 = vsub.s32 %v1980, %v1982
        %v1984 = vrot.slane %v1976, %v1983
        %v1986 = vunpack.c.l.s4 1934713408
        %v1987 = vunpack.c.0.s8 %v1986
        %v1988 = vlaneseq
        %v1989 = vshrl.u32 %v1988, 7
        %v1990 = vsub.s32 %v1987, %v1989
        %v1991 = vrot.slane %v1977, %v1990
        %v1992 = vcombine.low %v1968, %v1984
        %v1993 = vcombine.high %v1968, %v1984
        %v1994 = vcombine.low %v1975, %v1991
        %v1995 = vcombine.high %v1975, %v1991
        %1997 = vrot.lane.b32.xlu0 %v1993, 32
        %v1998 = vpop.permute.xlu0 %1997
        %2001 = vrot.lane.b32.xlu0 %v1994, 64
        %v2002 = vpop.permute.xlu0 %2001
        %2005 = vrot.lane.b32.xlu0 %v1995, 96
        %v2006 = vpop.permute.xlu0 %2005
        %v2008 = vsel %vm632, %v1992, %v1998
        %vm2009 = vcmask 523264
        %v2010 = vsel %vm2009, %v2008, %v2002
        %vm2011 = vcmask 785408
        %v2012 = vsel %vm2011, %v2010, %v2006
        %v2013 = vpack.c.bf16 %v2012, %v2012
        %v2014 = vld [vmem:[%s5] sm:$0xf]
        %v2015 = vld [vmem:[%s5 + $0x4] sm:$0xf]
        %v2016 = vld [vmem:[%s5 + $0x8] sm:$0xf]
        %v2017 = vld [vmem:[%s5 + $0xc] sm:$0xf]
        %v2018 = vld [vmem:[%s5 + $0x10] sm:$0xf]
        %v2019 = vld [vmem:[%s5 + $0x14] sm:$0xf]
        %v2020 = vld [vmem:[%s5 + $0x18] sm:$0xf]
        %v2021 = vld [vmem:[%s5 + $0x1c] sm:$0xf]
        %v2022 = vld [vmem:[%s5 + $0x20] sm:$0xf]
        %v2023 = vld [vmem:[%s5 + $0x24] sm:$0xf]
        %v2024 = vld [vmem:[%s5 + $0x28] sm:$0xf]
        %v2025 = vld [vmem:[%s5 + $0x2c] sm:$0xf]
        %v2026 = vld [vmem:[%s5 + $0x30] sm:$0xf]
        %v2027 = vld [vmem:[%s5 + $0x34] sm:$0xf]
        %v2028 = vld [vmem:[%s5 + $0x38] sm:$0xf]
        %v2029 = vld [vmem:[%s5 + $0x3c] sm:$0xf]
        %v2030 = vld [vmem:[%s6] sm:$0x1]
        %v2032 = vlaneseq
        %v2033 = vshrl.u32 %v2032, 7
        %v2034 = vsub.s32 0, %v2033
        %v2035 = vrot.slane %v2030, %v2034
        %v2053 = vunpack.c.l.b16 %v2014
        %v2054 = vunpack.c.l.b16 %v2015
        %v2055 = vunpack.c.l.b16 %v2016
        %v2056 = vunpack.c.l.b16 %v2017
        %v2057 = vunpack.c.l.b16 %v2018
        %v2058 = vunpack.c.l.b16 %v2019
        %v2059 = vunpack.c.l.b16 %v2020
        %v2060 = vunpack.c.l.b16 %v2021
        %v2061 = vunpack.c.l.b16 %v2022
        %v2062 = vunpack.c.l.b16 %v2023
        %v2063 = vunpack.c.l.b16 %v2024
        %v2064 = vunpack.c.l.b16 %v2025
        %v2065 = vunpack.c.l.b16 %v2026
        %v2066 = vunpack.c.l.b16 %v2027
        %v2067 = vunpack.c.l.b16 %v2028
        %v2068 = vunpack.c.l.b16 %v2029
        %v2069 = vpack.c.b16 %v2054, %v2053
        %v2070 = vpack.c.b16 %v2056, %v2055
        %v2071 = vpack.c.b16 %v2058, %v2057
        %v2072 = vpack.c.b16 %v2060, %v2059
        %v2073 = vpack.c.b16 %v2062, %v2061
        %v2074 = vpack.c.b16 %v2064, %v2063
        %v2075 = vpack.c.b16 %v2066, %v2065
        %v2076 = vpack.c.b16 %v2068, %v2067
        %2085 = vmatprep.subr.bf16.mxu0 0
        %2086 = vmatpush1.bf16.msra.mxu0 %v2069
        %2087 = vmatprep.subr.bf16.mxu0 0
        %2088 = vmatpush1.bf16.msra.mxu0 %v2070
        %2089 = vmatprep.subr.bf16.mxu0 0
        %2090 = vmatpush1.bf16.msra.mxu0 %v2071
        %2091 = vmatprep.subr.bf16.mxu0 0
        %2092 = vmatpush1.bf16.msra.mxu0 %v2072
        %2093 = vmatprep.subr.bf16.mxu0 0
        %2094 = vmatpush1.bf16.msra.mxu0 %v2073
        %2095 = vmatprep.subr.bf16.mxu0 0
        %2096 = vmatpush1.bf16.msra.mxu0 %v2074
        %2097 = vmatprep.subr.bf16.mxu0 0
        %2098 = vmatpush1.bf16.msra.mxu0 %v2075
        %2099 = vmatprep.subr.bf16.mxu0 0
        %2100 = vmatpush1.bf16.msra.mxu0 %v2076
        %2101 = vmatprep.subr.bf16.mxu0 0
        %2102 = vmatpush1.bf16.msra.mxu0 0
        %2103 = vmatprep.subr.bf16.mxu0 0
        %2104 = vmatpush1.bf16.msra.mxu0 0
        %2105 = vmatprep.subr.bf16.mxu0 0
        %2106 = vmatpush1.bf16.msra.mxu0 0
        %2107 = vmatprep.subr.bf16.mxu0 0
        %2108 = vmatpush1.bf16.msra.mxu0 0
        %2109 = vmatprep.subr.bf16.mxu0 0
        %2110 = vmatpush1.bf16.msra.mxu0 0
        %2111 = vmatprep.subr.bf16.mxu0 0
        %2112 = vmatpush1.bf16.msra.mxu0 0
        %2113 = vmatprep.subr.bf16.mxu0 0
        %2114 = vmatpush1.bf16.msra.mxu0 0
        %2115 = vmatprep.subr.bf16.mxu0 0
        %2116 = vmatpush1.bf16.msra.mxu0 0
        %2117 = vmatprep.mubr.bf16.mxu0 0
        %2118 = vmatmul.mubr.bf16.gmra.mrb[0].mxu0 %v2013
        %v2119 = vpop.f32.mrb[0].mxu0
        %v2120 = vadd.f32 %v2035, %v2119
        %v2121 = vpop.f32.mrb[0].mxu0
        %v2122 = vpop.f32.mrb[0].mxu0
        %v2123 = vpop.f32.mrb[0].mxu0
        %2124 = vdwg.mxu0
        %v2125 = vadd.f32 %v671, %v2120
        %v2126 = vld [vmem:[%s7] sm:$0x1]
        %v2127 = vld [vmem:[%s8] sm:$0x1]
        %2128 = vadd.xlane.f32.xlu0 %v2125
        %v2129 = vpop.xlane.xlu0 %2128
        %v2130 = vmul.f32 %v2129, 0.03125
        %v2131 = vsub.f32 %v2125, %v2130
        %v2132 = vsel %vm606, 1, 0
        %vm2133 = vcmp.eq.s32.totalorder %v2132, 1
        %v2134 = vsel %vm2133, %v2131, 0.0
        %v2135 = vmul.f32 %v2134, %v2134
        %2136 = vadd.xlane.f32.xlu0 %v2135
        %v2137 = vpop.xlane.xlu0 %2136
        %v2138 = vmul.f32 %v2137, 0.03125
        %v2139 = vadd.f32 %v2138, 1e-05
        %v2140 = vrsqrt.pop %v2139
        %v2141 = vmul.f32 %v2134, %v2140
        %v2143 = vlaneseq
        %v2144 = vshrl.u32 %v2143, 7
        %v2145 = vsub.s32 0, %v2144
        %v2146 = vrot.slane %v2126, %v2145
        %v2148 = vmul.f32 %v2141, %v2146
        %v2150 = vlaneseq
        %v2151 = vshrl.u32 %v2150, 7
        %v2152 = vsub.s32 0, %v2151
        %v2153 = vrot.slane %v2127, %v2152
        %v2155 = vadd.f32 %v2148, %v2153
        %v2156 = vpack.c.bf16 %v2155, %v2155
        %v2157 = vld [vmem:[#allocation7] sm:$0xf]
        %v2158 = vld [vmem:[#allocation7 + $0x4] sm:$0xf]
        %v2159 = vld [vmem:[#allocation7 + $0x8] sm:$0xf]
        %v2160 = vld [vmem:[#allocation7 + $0xc] sm:$0xf]
        %v2161 = vld [vmem:[#allocation7 + $0x10] sm:$0xf]
        %v2162 = vld [vmem:[#allocation7 + $0x14] sm:$0xf]
        %v2163 = vld [vmem:[#allocation7 + $0x18] sm:$0xf]
        %v2164 = vld [vmem:[#allocation7 + $0x1c] sm:$0xf]
        %v2165 = vld [vmem:[#allocation7 + $0x20] sm:$0xf]
        %v2166 = vld [vmem:[#allocation7 + $0x24] sm:$0xf]
        %v2167 = vld [vmem:[#allocation7 + $0x28] sm:$0xf]
        %v2168 = vld [vmem:[#allocation7 + $0x2c] sm:$0xf]
        %v2169 = vld [vmem:[#allocation7 + $0x30] sm:$0xf]
        %v2170 = vld [vmem:[#allocation7 + $0x34] sm:$0xf]
        %v2171 = vld [vmem:[#allocation7 + $0x38] sm:$0xf]
        %v2172 = vld [vmem:[#allocation7 + $0x3c] sm:$0xf]
        %v2173 = vld [vmem:[%s10] sm:$0x1]
        %v2175 = vlaneseq
        %v2176 = vshrl.u32 %v2175, 7
        %v2177 = vsub.s32 0, %v2176
        %v2178 = vrot.slane %v2173, %v2177
        %v2196 = vunpack.c.l.b16 %v2157
        %v2197 = vunpack.c.l.b16 %v2158
        %v2198 = vunpack.c.l.b16 %v2159
        %v2199 = vunpack.c.l.b16 %v2160
        %v2200 = vunpack.c.l.b16 %v2161
        %v2201 = vunpack.c.l.b16 %v2162
        %v2202 = vunpack.c.l.b16 %v2163
        %v2203 = vunpack.c.l.b16 %v2164
        %v2204 = vunpack.c.l.b16 %v2165
        %v2205 = vunpack.c.l.b16 %v2166
        %v2206 = vunpack.c.l.b16 %v2167
        %v2207 = vunpack.c.l.b16 %v2168
        %v2208 = vunpack.c.l.b16 %v2169
        %v2209 = vunpack.c.l.b16 %v2170
        %v2210 = vunpack.c.l.b16 %v2171
        %v2211 = vunpack.c.l.b16 %v2172
        %v2212 = vpack.c.b16 %v2197, %v2196
        %v2213 = vpack.c.b16 %v2199, %v2198
        %v2214 = vpack.c.b16 %v2201, %v2200
        %v2215 = vpack.c.b16 %v2203, %v2202
        %v2216 = vpack.c.b16 %v2205, %v2204
        %v2217 = vpack.c.b16 %v2207, %v2206
        %v2218 = vpack.c.b16 %v2209, %v2208
        %v2219 = vpack.c.b16 %v2211, %v2210
        %2228 = vmatprep.subr.bf16.mxu0 0
        %2229 = vmatpush1.bf16.msra.mxu0 %v2212
        %2230 = vmatprep.subr.bf16.mxu0 0
        %2231 = vmatpush1.bf16.msra.mxu0 %v2213
        %2232 = vmatprep.subr.bf16.mxu0 0
        %2233 = vmatpush1.bf16.msra.mxu0 %v2214
        %2234 = vmatprep.subr.bf16.mxu0 0
        %2235 = vmatpush1.bf16.msra.mxu0 %v2215
        %2236 = vmatprep.subr.bf16.mxu0 0
        %2237 = vmatpush1.bf16.msra.mxu0 %v2216
        %2238 = vmatprep.subr.bf16.mxu0 0
        %2239 = vmatpush1.bf16.msra.mxu0 %v2217
        %2240 = vmatprep.subr.bf16.mxu0 0
        %2241 = vmatpush1.bf16.msra.mxu0 %v2218
        %2242 = vmatprep.subr.bf16.mxu0 0
        %2243 = vmatpush1.bf16.msra.mxu0 %v2219
        %2244 = vmatprep.subr.bf16.mxu0 0
        %2245 = vmatpush1.bf16.msra.mxu0 0
        %2246 = vmatprep.subr.bf16.mxu0 0
        %2247 = vmatpush1.bf16.msra.mxu0 0
        %2248 = vmatprep.subr.bf16.mxu0 0
        %2249 = vmatpush1.bf16.msra.mxu0 0
        %2250 = vmatprep.subr.bf16.mxu0 0
        %2251 = vmatpush1.bf16.msra.mxu0 0
        %2252 = vmatprep.subr.bf16.mxu0 0
        %2253 = vmatpush1.bf16.msra.mxu0 0
        %2254 = vmatprep.subr.bf16.mxu0 0
        %2255 = vmatpush1.bf16.msra.mxu0 0
        %2256 = vmatprep.subr.bf16.mxu0 0
        %2257 = vmatpush1.bf16.msra.mxu0 0
        %2258 = vmatprep.subr.bf16.mxu0 0
        %2259 = vmatpush1.bf16.msra.mxu0 0
        %2260 = vmatprep.mubr.bf16.mxu0 0
        %2261 = vmatmul.mubr.bf16.gmra.mrb[0].mxu0 %v2156
        %v2262 = vpop.f32.mrb[0].mxu0
        %v2263 = vadd.f32 %v2178, %v2262
        %v2264 = vpop.f32.mrb[0].mxu0
        %v2265 = vpop.f32.mrb[0].mxu0
        %v2266 = vpop.f32.mrb[0].mxu0
        %2267 = vdwg.mxu0
        %v2268 = vmax.f32 %v2263, 0.0
        %v2269 = vpack.c.bf16 %v2268, %v2268
        %v2270 = vld [vmem:[#allocation8] sm:$0xf]
        %v2271 = vld [vmem:[#allocation8 + $0x4] sm:$0xf]
        %v2272 = vld [vmem:[#allocation8 + $0x8] sm:$0xf]
        %v2273 = vld [vmem:[#allocation8 + $0xc] sm:$0xf]
        %v2274 = vld [vmem:[#allocation8 + $0x10] sm:$0xf]
        %v2275 = vld [vmem:[#allocation8 + $0x14] sm:$0xf]
        %v2276 = vld [vmem:[#allocation8 + $0x18] sm:$0xf]
        %v2277 = vld [vmem:[#allocation8 + $0x1c] sm:$0xf]
        %v2278 = vld [vmem:[#allocation8 + $0x20] sm:$0xf]
        %v2279 = vld [vmem:[#allocation8 + $0x24] sm:$0xf]
        %v2280 = vld [vmem:[#allocation8 + $0x28] sm:$0xf]
        %v2281 = vld [vmem:[#allocation8 + $0x2c] sm:$0xf]
        %v2282 = vld [vmem:[#allocation8 + $0x30] sm:$0xf]
        %v2283 = vld [vmem:[#allocation8 + $0x34] sm:$0xf]
        %v2284 = vld [vmem:[#allocation8 + $0x38] sm:$0xf]
        %v2285 = vld [vmem:[#allocation8 + $0x3c] sm:$0xf]
        %v2286 = vld [vmem:[%s12] sm:$0x1]
        %v2288 = vlaneseq
        %v2289 = vshrl.u32 %v2288, 7
        %v2290 = vsub.s32 0, %v2289
        %v2291 = vrot.slane %v2286, %v2290
        %v2309 = vunpack.c.l.b16 %v2270
        %v2310 = vunpack.c.l.b16 %v2271
        %v2311 = vunpack.c.l.b16 %v2272
        %v2312 = vunpack.c.l.b16 %v2273
        %v2313 = vunpack.c.l.b16 %v2274
        %v2314 = vunpack.c.l.b16 %v2275
        %v2315 = vunpack.c.l.b16 %v2276
        %v2316 = vunpack.c.l.b16 %v2277
        %v2317 = vunpack.c.l.b16 %v2278
        %v2318 = vunpack.c.l.b16 %v2279
        %v2319 = vunpack.c.l.b16 %v2280
        %v2320 = vunpack.c.l.b16 %v2281
        %v2321 = vunpack.c.l.b16 %v2282
        %v2322 = vunpack.c.l.b16 %v2283
        %v2323 = vunpack.c.l.b16 %v2284
        %v2324 = vunpack.c.l.b16 %v2285
        %v2325 = vpack.c.b16 %v2310, %v2309
        %v2326 = vpack.c.b16 %v2312, %v2311
        %v2327 = vpack.c.b16 %v2314, %v2313
        %v2328 = vpack.c.b16 %v2316, %v2315
        %v2329 = vpack.c.b16 %v2318, %v2317
        %v2330 = vpack.c.b16 %v2320, %v2319
        %v2331 = vpack.c.b16 %v2322, %v2321
        %v2332 = vpack.c.b16 %v2324, %v2323
        %2341 = vmatprep.subr.bf16.mxu0 0
        %2342 = vmatpush1.bf16.msra.mxu0 %v2325
        %2343 = vmatprep.subr.bf16.mxu0 0
        %2344 = vmatpush1.bf16.msra.mxu0 %v2326
        %2345 = vmatprep.subr.bf16.mxu0 0
        %2346 = vmatpush1.bf16.msra.mxu0 %v2327
        %2347 = vmatprep.subr.bf16.mxu0 0
        %2348 = vmatpush1.bf16.msra.mxu0 %v2328
        %2349 = vmatprep.subr.bf16.mxu0 0
        %2350 = vmatpush1.bf16.msra.mxu0 %v2329
        %2351 = vmatprep.subr.bf16.mxu0 0
        %2352 = vmatpush1.bf16.msra.mxu0 %v2330
        %2353 = vmatprep.subr.bf16.mxu0 0
        %2354 = vmatpush1.bf16.msra.mxu0 %v2331
        %2355 = vmatprep.subr.bf16.mxu0 0
        %2356 = vmatpush1.bf16.msra.mxu0 %v2332
        %2357 = vmatprep.subr.bf16.mxu0 0
        %2358 = vmatpush1.bf16.msra.mxu0 0
        %2359 = vmatprep.subr.bf16.mxu0 0
        %2360 = vmatpush1.bf16.msra.mxu0 0
        %2361 = vmatprep.subr.bf16.mxu0 0
        %2362 = vmatpush1.bf16.msra.mxu0 0
        %2363 = vmatprep.subr.bf16.mxu0 0
        %2364 = vmatpush1.bf16.msra.mxu0 0
        %2365 = vmatprep.subr.bf16.mxu0 0
        %2366 = vmatpush1.bf16.msra.mxu0 0
        %2367 = vmatprep.subr.bf16.mxu0 0
        %2368 = vmatpush1.bf16.msra.mxu0 0
        %2369 = vmatprep.subr.bf16.mxu0 0
        %2370 = vmatpush1.bf16.msra.mxu0 0
        %2371 = vmatprep.subr.bf16.mxu0 0
        %2372 = vmatpush1.bf16.msra.mxu0 0
        %2373 = vmatprep.mubr.bf16.mxu0 0
        %2374 = vmatmul.mubr.bf16.gmra.mrb[0].mxu0 %v2269
        %v2375 = vpop.f32.mrb[0].mxu0
        %v2376 = vadd.f32 %v2291, %v2375
        %v2377 = vpop.f32.mrb[0].mxu0
        %v2378 = vpop.f32.mrb[0].mxu0
        %v2379 = vpop.f32.mrb[0].mxu0
        %2380 = vdwg.mxu0
        %v2381 = vadd.f32 %v2155, %v2376
        %v2382 = vld [vmem:[%s13] sm:$0x1]
        %v2383 = vld [vmem:[%s14] sm:$0x1]
        %2384 = vadd.xlane.f32.xlu0 %v2381
        %v2385 = vpop.xlane.xlu0 %2384
        %v2386 = vmul.f32 %v2385, 0.03125
        %v2387 = vsub.f32 %v2381, %v2386
        %v2388 = vsel %vm2133, %v2387, 0.0
        %v2389 = vmul.f32 %v2388, %v2388
        %2390 = vadd.xlane.f32.xlu0 %v2389
        %v2391 = vpop.xlane.xlu0 %2390
        %v2392 = vmul.f32 %v2391, 0.03125
        %v2393 = vadd.f32 %v2392, 1e-05
        %v2394 = vrsqrt.pop %v2393
        %v2395 = vmul.f32 %v2388, %v2394
        %v2397 = vlaneseq
        %v2398 = vshrl.u32 %v2397, 7
        %v2399 = vsub.s32 0, %v2398
        %v2400 = vrot.slane %v2382, %v2399
        %v2402 = vmul.f32 %v2395, %v2400
        %v2404 = vlaneseq
        %v2405 = vshrl.u32 %v2404, 7
        %v2406 = vsub.s32 0, %v2405
        %v2407 = vrot.slane %v2383, %v2406
        %v2409 = vadd.f32 %v2402, %v2407
        %v2410 = vpack.c.bf16 %v2409, %v2409
        %v2411 = vld [vmem:[%s15] sm:$0xf]
        %v2412 = vld [vmem:[%s15 + $0x4] sm:$0xf]
        %v2413 = vld [vmem:[%s15 + $0x8] sm:$0xf]
        %v2414 = vld [vmem:[%s15 + $0xc] sm:$0xf]
        %v2415 = vld [vmem:[%s15 + $0x10] sm:$0xf]
        %v2416 = vld [vmem:[%s15 + $0x14] sm:$0xf]
        %v2417 = vld [vmem:[%s15 + $0x18] sm:$0xf]
        %v2418 = vld [vmem:[%s15 + $0x1c] sm:$0xf]
        %v2419 = vld [vmem:[%s15 + $0x20] sm:$0xf]
        %v2420 = vld [vmem:[%s15 + $0x24] sm:$0xf]
        %v2421 = vld [vmem:[%s15 + $0x28] sm:$0xf]
        %v2422 = vld [vmem:[%s15 + $0x2c] sm:$0xf]
        %v2423 = vld [vmem:[%s15 + $0x30] sm:$0xf]
        %v2424 = vld [vmem:[%s15 + $0x34] sm:$0xf]
        %v2425 = vld [vmem:[%s15 + $0x38] sm:$0xf]
        %v2426 = vld [vmem:[%s15 + $0x3c] sm:$0xf]
        %v2427 = vld [vmem:[%s16] sm:$0x1]
        %v2429 = vlaneseq
        %v2430 = vshrl.u32 %v2429, 7
        %v2431 = vsub.s32 0, %v2430
        %v2432 = vrot.slane %v2427, %v2431
        %v2450 = vunpack.c.l.b16 %v2411
        %v2451 = vunpack.c.l.b16 %v2412
        %v2452 = vunpack.c.l.b16 %v2413
        %v2453 = vunpack.c.l.b16 %v2414
        %v2454 = vunpack.c.l.b16 %v2415
        %v2455 = vunpack.c.l.b16 %v2416
        %v2456 = vunpack.c.l.b16 %v2417
        %v2457 = vunpack.c.l.b16 %v2418
        %v2458 = vunpack.c.l.b16 %v2419
        %v2459 = vunpack.c.l.b16 %v2420
        %v2460 = vunpack.c.l.b16 %v2421
        %v2461 = vunpack.c.l.b16 %v2422
        %v2462 = vunpack.c.l.b16 %v2423
        %v2463 = vunpack.c.l.b16 %v2424
        %v2464 = vunpack.c.l.b16 %v2425
        %v2465 = vunpack.c.l.b16 %v2426
        %v2466 = vpack.c.b16 %v2451, %v2450
        %v2467 = vpack.c.b16 %v2453, %v2452
        %v2468 = vpack.c.b16 %v2455, %v2454
        %v2469 = vpack.c.b16 %v2457, %v2456
        %v2470 = vpack.c.b16 %v2459, %v2458
        %v2471 = vpack.c.b16 %v2461, %v2460
        %v2472 = vpack.c.b16 %v2463, %v2462
        %v2473 = vpack.c.b16 %v2465, %v2464
        %2482 = vmatprep.subr.bf16.mxu0 0
        %2483 = vmatpush1.bf16.msra.mxu0 %v2466
        %2484 = vmatprep.subr.bf16.mxu0 0
        %2485 = vmatpush1.bf16.msra.mxu0 %v2467
        %2486 = vmatprep.subr.bf16.mxu0 0
        %2487 = vmatpush1.bf16.msra.mxu0 %v2468
        %2488 = vmatprep.subr.bf16.mxu0 0
        %2489 = vmatpush1.bf16.msra.mxu0 %v2469
        %2490 = vmatprep.subr.bf16.mxu0 0
        %2491 = vmatpush1.bf16.msra.mxu0 %v2470
        %2492 = vmatprep.subr.bf16.mxu0 0
        %2493 = vmatpush1.bf16.msra.mxu0 %v2471
        %2494 = vmatprep.subr.bf16.mxu0 0
        %2495 = vmatpush1.bf16.msra.mxu0 %v2472
        %2496 = vmatprep.subr.bf16.mxu0 0
        %2497 = vmatpush1.bf16.msra.mxu0 %v2473
        %2498 = vmatprep.subr.bf16.mxu0 0
        %2499 = vmatpush1.bf16.msra.mxu0 0
        %2500 = vmatprep.subr.bf16.mxu0 0
        %2501 = vmatpush1.bf16.msra.mxu0 0
        %2502 = vmatprep.subr.bf16.mxu0 0
        %2503 = vmatpush1.bf16.msra.mxu0 0
        %2504 = vmatprep.subr.bf16.mxu0 0
        %2505 = vmatpush1.bf16.msra.mxu0 0
        %2506 = vmatprep.subr.bf16.mxu0 0
        %2507 = vmatpush1.bf16.msra.mxu0 0
        %2508 = vmatprep.subr.bf16.mxu0 0
        %2509 = vmatpush1.bf16.msra.mxu0 0
        %2510 = vmatprep.subr.bf16.mxu0 0
        %2511 = vmatpush1.bf16.msra.mxu0 0
        %2512 = vmatprep.subr.bf16.mxu0 0
        %2513 = vmatpush1.bf16.msra.mxu0 0
        %2514 = vmatprep.mubr.bf16.mxu0 0
        %2515 = vmatmul.mubr.bf16.gmra.mrb[0].mxu0 %v2410
        %v2516 = vpop.f32.mrb[0].mxu0
        %v2517 = vadd.f32 %v2432, %v2516
        %v2518 = vpop.f32.mrb[0].mxu0
        %v2519 = vpop.f32.mrb[0].mxu0
        %v2520 = vpop.f32.mrb[0].mxu0
        %2521 = vdwg.mxu0
        %2522 = vst.msk [vmem:[%s598] sm:$0xff] %vm632, %v2517
        %s2523 = sand.u32 %s404, 1
        %s2524 = scalar_lea.sflag [#allocation4], %s2523
        %s2525 = sand.u32 %s404, 1
        %s2526 = smul.addr %s2525, 8
        %s2527 = scalar_lea.vmem [#allocation10], %s2526
        // Predicated region
        $region105: #{tpu_custom_call.1} parent=87 // pred_check
          %p2528 = pneg %p414
        $region106: #{tpu_custom_call.1} parent=87 // pred_check_branch
          %2530 = sbr.rel (%p2528) target = $region108
        $region107: #{tpu_custom_call.1} parent=87 // pred_region
          %s2532 = ssub.s32 128, 128
          %2533 = vsyncadd %s2524, %s2532
          %s2534 = smul.addr %s34, 128
          %s2535 = scalar_lea.hbm %s17, %s2534
          %s2537 = sshll.u32 %s2527, 4
          %s2538 = int_to_ptr.vmem [resolvable:$true] %s2537
          %2540 = dma.vmem_to_hbm [thread:$0]  %s2538, 128, %s2535, %s2524
        $region108: #{tpu_custom_call.1} parent=87 // pred_fallthru
          _
      $region88: #{tpu_custom_call.1} parent=5 // pred_fallthru
        _
      %p2541 = scmp.le.s32.totalorder 2, %s29
      // Predicated region
      $region109: #{tpu_custom_call.1} parent=5 // pred_check
        %p2542 = pneg %p2541
      $region110: #{tpu_custom_call.1} parent=5 // pred_check_branch
        %2544 = sbr.rel (%p2542) target = $region112
      $region111: #{tpu_custom_call.1} parent=5 // pred_region
        %s2545 = ssub.s32 %s29, 2
        // Predicated region
        $region113: #{tpu_custom_call.1} parent=111 // pred_check
          %p2546 = pneg %p420
        $region114: #{tpu_custom_call.1} parent=111 // pred_check_branch
          %2548 = sbr.rel (%p2546) target = $region116
        $region115: #{tpu_custom_call.1} parent=111 // pred_region
          %s2549 = sand.u32 %s405, 1
          %s2550 = scalar_lea.sflag [#allocation4], %s2549
          %s2551 = sand.u32 %s405, 1
          %s2552 = smul.addr %s2551, 8
          %s2553 = scalar_lea.vmem [#allocation10], %s2552
          %2554 = dma.done %s2550, 128
        $region116: #{tpu_custom_call.1} parent=111 // pred_fallthru
          _
      $region112: #{tpu_custom_call.1} parent=5 // pred_fallthru
        _
    $region6: #{tpu_custom_call.1} parent=1 // loop_footer
      %s33 = sadd.s32 1, %s29
    $region7: #{tpu_custom_call.1} parent=1 // loop_footer_branch
      %28 = sbr.rel target = $region3
    $region8: #{tpu_custom_call.1} parent=1 // loop_exit
      _
    %2555 = vsyncpa [#allocation3], 1
    %s2556 = scalar_lea.sflag [#allocation3], 1
    %2557 = vsyncpa %s2556, 1
    %2558 = vsyncpa [#allocation6], 1
    %2559 = vsyncpa [#allocation9], 1
    %2560 = vsyncpa [#allocation4], 1
    %s2561 = scalar_lea.sflag [#allocation4], 1
    %2562 = vsyncpa %s2561, 1

</llo_original>
